<compile_context>
chip_gen: v6e
topology: v6e:2x2x1
jax: 0.10.0
libtpu: 0.0.40
codegen_flags: <defaults>
</compile_context>

<pallas_src>
import jax
import jax.numpy as jnp
from jax.experimental import pallas as pl
from jax.experimental.pallas import tpu as pltpu

F = 32   # num_features
E = 20   # size_of_expansion


def _silu(x):
    return x * jax.nn.sigmoid(x)


# --------------------------------------------------------------------------
# Kernel
# --------------------------------------------------------------------------
def _kernel(stgt_ref, vtgt_ref, s_slab_ref, leftc_ref, expaug_ref, dir_ref,
            wm4_ref, wmc_ref, wuv_ref, wu1_ref, bu1_ref, wu2_ref, bu2_ref,
            out_ref):
    TN = stgt_ref.shape[0]          # target tile size
    nf = stgt_ref.shape[1]          # num_features
    N = s_slab_ref.shape[0]         # number of source nodes
    f32 = jnp.float32

    # ---------------- Message ----------------
    # Pairwise stream may be stored bf16 in HBM; cast once, keep arithmetic f32.
    expaug = expaug_ref[...].astype(f32)                               # [TN*N, E+1]

    # packed (a,a,a,b) block  (weight columns = [Wa|Wa|Wa|Wb])          [TN*N, 4F]
    mr4 = jnp.dot(expaug, wm4_ref[...], preferred_element_type=f32)
    # c block                                                            [TN*N, F]
    mrc = jnp.dot(expaug, wmc_ref[...], preferred_element_type=f32)

    # lane-dense packed reduction over sources (full 128 lanes per vreg op):
    #   delta4[:, d*F:(d+1)*F] = sum_s mask*mr_a * left_a * v_src[:,d]  (d = x,y,z)
    #   delta4[:, 3F:        ] = sum_s mask*mr_b * left_b               (delta scalar)
    packed = mr4.reshape(TN, N, 4 * nf) * s_slab_ref[...][None, :, :]  # [TN, N, 4F]
    delta4 = jnp.sum(packed, axis=1)                                   # [TN, 4F]

    # direction ("c") contribution — kept on the VPU (M=3 MXU matmuls are wasteful)
    pc = leftc_ref[...][None, :, :] * mrc.reshape(TN, N, nf)           # [TN, N, F]

    s1 = stgt_ref[...] + delta4[:, 3 * nf:]                            # scalar residual
    v1 = []
    for d in range(3):
        dir_d = dir_ref[d].astype(f32)                                 # [TN, N]
        dvr_d = jnp.sum(dir_d[:, :, None] * pc, axis=1)                # [TN, F]
        v1.append(vtgt_ref[d] + delta4[:, d * nf:(d + 1) * nf] + dvr_d)

    # ---------------- Update ----------------
    v1_all = jnp.concatenate(v1, axis=0)                               # [3*TN, F]
    # fused U|V matmul: halves MXU pushes / result pops in the update stage
    luru = jnp.dot(v1_all, wuv_ref[...], preferred_element_type=f32)   # [3*TN, 2F]
    lu = [luru[d * TN:(d + 1) * TN, :nf] for d in range(3)]
    ru = [luru[d * TN:(d + 1) * TN, nf:] for d in range(3)]

    # NOTE: no epsilon (matches torch.linalg.norm in the reference forward);
    # a backward pass would need one for exactly-zero vectors.
    right_norm = jnp.sqrt(ru[0] * ru[0] + ru[1] * ru[1] + ru[2] * ru[2])  # [TN, F]
    inner = lu[0] * ru[0] + lu[1] * ru[1] + lu[2] * ru[2]                 # [TN, F]

    rc = jnp.concatenate([s1, right_norm], axis=-1)                     # [TN, 2F]
    h2 = _silu(jnp.dot(rc, wu1_ref[...], preferred_element_type=f32) + bu1_ref[...])
    rf = jnp.dot(h2, wu2_ref[...], preferred_element_type=f32) + bu2_ref[...]
    a2 = rf[:, :nf]
    b2 = rf[:, nf:2 * nf]
    c2 = rf[:, 2 * nf:]

    s_out = s1 + inner * b2 + c2                                        # [TN, F]
    v_out = [v1[d] + a2 * lu[d] for d in range(3)]                      # 3 x [TN, F]

    # lane-dense packed output: [TN, 4F] = [ scalar | vx | vy | vz ]
    out_ref[...] = jnp.concatenate([s_out] + v_out, axis=-1).astype(out_ref.dtype)


# --------------------------------------------------------------------------
# VMEM-aware tile sizing
# --------------------------------------------------------------------------
def _lane_pad(x, lane=128):
    return ((x + lane - 1) // lane) * lane


def _vmem_footprint_bytes(tile_n, n, nf, ne1, pair_itemsize):
    """Rough per-core VMEM footprint, *including* 128-lane padding of the
    (E+1)=21-wide expansion block (~6x its nominal bytes), double buffering of
    streamed blocks, and f32 message-stage intermediates."""
    f32 = 4
    pairs = tile_n * n
    streamed = 2 * (pairs * _lane_pad(ne1) * pair_itemsize        # exp_aug rows lane-padded
                    + 3 * tile_n * _lane_pad(n) * pair_itemsize   # direction [3, tile_n, N]
                    + tile_n * _lane_pad(nf) * f32                # scalar target tile
                    + 3 * tile_n * _lane_pad(nf) * f32            # vector target tile
                    + tile_n * _lane_pad(4 * nf) * f32)           # packed output tile
    resident = 2 * (n * _lane_pad(4 * nf) * f32                   # S slab
                    + n * _lane_pad(nf) * f32)                    # left_c
    interm = pairs * (_lane_pad(4 * nf) + 2 * _lane_pad(nf)) * f32  # mr4 / mrc / pc temps
    return streamed + resident + interm + (2 << 20)               # weights + margin


def _device_vmem_capacity():
    try:
        return int(pltpu.get_tpu_info().vmem_capacity_bytes)
    except Exception:
        return 64 << 20       # conservative: v7x per-TensorCore capacity


def _num_tensorcores():
    # Heuristic: dual-TC / megacore parts (v4 megacore, v7x) benefit from an
    # even grid-step count on the single "parallel" axis.
    try:
        kind = jax.devices()[0].device_kind.lower()
        if "v4" in kind or "7" in kind:
            return 2
    except Exception:
        pass
    return 1


def _pick_tile(n, nf, ne1, pair_itemsize, budget, num_tc):
    cands = sorted({t for t in range(8, n + 1, 8) if n % t == 0} | {n})
    fits = [t for t in cands
            if _vmem_footprint_bytes(t, n, nf, ne1, pair_itemsize) <= budget]
    if not fits:
        fits = [cands[0]]
    if num_tc > 1:
        even = [t for t in fits if (n // t) % num_tc == 0]
        if even:
            return max(even)
    return max(fits)          # single-TC: one big tile (fewer pipeline steps)


# --------------------------------------------------------------------------
# Wrapper
# --------------------------------------------------------------------------
def deepdf_message_and_update(scalar, vector, expansion, direction, mask, params,
                              tile_n=None, pair_dtype=jnp.bfloat16,
                              vmem_limit_bytes=None):
    """Forward pass of DeepDFText0_MessageAndUpdate.

    scalar [N,1,F], vector [N,3,F], expansion [N,N,E], direction [N,N,3],
    mask [N,N,1] -> (scalar_out [N,1,F], vector_out [N,3,F]).

    pair_dtype: HBM storage dtype of the streamed O(N^2) pairwise tensors
    (masked expansion and direction).  bf16 halves the dominant HBM traffic;
    all arithmetic stays f32.  Pass jnp.float32 for bit-tighter numerics.
    """
    N, _, nf = scalar.shape
    ne = expansion.shape[-1]
    ne1 = ne + 1
    f32 = jnp.float32

    cap = _device_vmem_capacity()
    budget = int(cap * 0.78)                    # ~50 MiB on v7x, ~100 MiB on v5e/v6e
    num_tc = _num_tensorcores()
    pair_itemsize = jnp.dtype(pair_dtype).itemsize
    if tile_n is None:
        tile_n = _pick_tile(N, nf, ne1, pair_itemsize, budget, num_tc)
    assert N % tile_n == 0 and (tile_n % 8 == 0 or tile_n == N)

    s2 = scalar.reshape(N, nf).astype(f32)                          # [N, F]
    v3 = jnp.transpose(vector.astype(f32), (1, 0, 2))               # [3, N, F]
    m2 = mask.reshape(N, N, 1).astype(f32)                          # [N, N, 1]

    # --- hoisted: msg_left MLP (depends only on source scalars) ---
    h = _silu(s2 @ params["Wm1"] + params["bm1"])
    left = h @ params["Wm2"] + params["bm2"]                        # [N, 3F]
    la, lb, left_c = left[:, :nf], left[:, nf:2 * nf], left[:, 2 * nf:]

    # lane-dense source slab: [left_a*vx | left_a*vy | left_a*vz | left_b] -> [N, 128]
    s_slab = jnp.concatenate([la * v3[0], la * v3[1], la * v3[2], lb], axis=-1)

    # --- fold mask + msg_right bias into an augmented expansion matmul ---
    exp_aug = jnp.concatenate([expansion.astype(f32) * m2, m2], axis=-1)
    exp_aug = exp_aug.reshape(N * N, ne1).astype(pair_dtype)        # [N*N, E+1]

    dir_t = jnp.transpose(direction, (2, 0, 1)).astype(pair_dtype)  # [3, N_tgt, N_src]

    wm3_aug = jnp.concatenate([params["Wm3"], params["bm3"]], axis=0)   # [E+1, 3F]
    wa, wb, wc = wm3_aug[:, :nf], wm3_aug[:, nf:2 * nf], wm3_aug[:, 2 * nf:]
    wm4 = jnp.concatenate([wa, wa, wa, wb], axis=-1)                # [E+1, 4F] packed
    wmc = wc                                                        # [E+1, F]
    wuv = jnp.concatenate([params["WU"], params["WV"]], axis=-1)    # [F, 2F] fused U|V

    weights = [wm4, wmc, wuv, params["Wu1"], params["bu1"],
               params["Wu2"], params["bu2"]]

    in_specs = [
        pl.BlockSpec((tile_n, nf), lambda i: (i, 0)),               # scalar target tile
        pl.BlockSpec((3, tile_n, nf), lambda i: (0, i, 0)),         # vector target tile
        pl.BlockSpec((N, 4 * nf), lambda i: (0, 0)),                # source slab (resident)
        pl.BlockSpec((N, nf), lambda i: (0, 0)),                    # left_c (resident)
        pl.BlockSpec((tile_n * N, ne1), lambda i: (i, 0)),          # masked expansion (flat)
        pl.BlockSpec((3, tile_n, N), lambda i: (0, i, 0)),          # direction (d, tgt, src)
    ] + [pl.BlockSpec(w.shape, lambda i, nd=w.ndim: (0,) * nd) for w in weights]

    out_spec = pl.BlockSpec((tile_n, 4 * nf), lambda i: (i, 0))     # lane-dense 4F = 128
    out_shape = jax.ShapeDtypeStruct((N, 4 * nf), scalar.dtype)

    if vmem_limit_bytes is None:
        fp = _vmem_footprint_bytes(tile_n, N, nf, ne1, pair_itemsize)
        vmem_limit_bytes = max(32 << 20, min(int(cap * 0.85), fp + (16 << 20)))
        vmem_limit_bytes = min(vmem_limit_bytes, int(cap * 0.9))

    # TODO(synk): if profiling shows exposed DMA on 128-MiB parts (v5e/v6e),
    # add pipeline_mode=pl.Buffered(3) on the exp_aug/dir_t specs (not on v7x).
    packed = pl.pallas_call(
        _kernel,
        grid=(N // tile_n,),
        in_specs=in_specs,
        out_specs=out_spec,
        out_shape=out_shape,
        compiler_params=pltpu.CompilerParams(
            dimension_semantics=("parallel",),
            vmem_limit_bytes=vmem_limit_bytes),
    )(s2, v3, s_slab, left_c, exp_aug, dir_t, *weights)

    out_s = packed[:, :nf].reshape(N, 1, nf)
    out_v = packed[:, nf:].reshape(N, 3, nf)
    return out_s, out_v


# ---------------- deterministic parameter init (synthetic weights) ----------------
def init_params(key, nf=F, ne=E):
    def linear(k, fan_in, fan_out, bias=True):
        k1, k2 = jax.random.split(k)
        bound = 1.0 / float(fan_in) ** 0.5
        w = jax.random.uniform(k1, (fan_in, fan_out), jnp.float32, -bound, bound)
        if not bias:
            return (w,)
        b = jax.random.uniform(k2, (1, fan_out), jnp.float32, -bound, bound)
        return w, b

    keys = jax.random.split(key, 7)
    p = {}
    p["Wm1"], p["bm1"] = linear(keys[0], nf, nf)            # msg_left[0]
    p["Wm2"], p["bm2"] = linear(keys[1], nf, 3 * nf)        # msg_left[2]
    p["Wm3"], p["bm3"] = linear(keys[2], ne, 3 * nf)        # msg_right[0]
    p["Wu1"], p["bu1"] = linear(keys[3], 2 * nf, nf)        # upd_right[0]
    p["Wu2"], p["bu2"] = linear(keys[4], nf, 3 * nf)        # upd_right[2]
    (p["WU"],) = linear(keys[5], nf, nf, bias=False)        # U
    (p["WV"],) = linear(keys[6], nf, nf, bias=False)        # V
    return p


# ---------------- pure-JAX reference (mirrors the PyTorch broadcasting) ----------------
def ref_forward(scalar, vector, expansion, direction, mask, p):
    nf = scalar.shape[-1]
    # --- message ---
    h = _silu(scalar @ p["Wm1"] + p["bm1"])
    left_mul = h @ p["Wm2"] + p["bm2"]                              # [N, 1, 3F]
    right_mul = (expansion @ p["Wm3"] + p["bm3"])[..., None, :]     # [N, N, 1, 3F]
    prod = left_mul * right_mul
    a, b, c = prod[..., :nf], prod[..., nf:2 * nf], prod[..., 2 * nf:]
    mask_ = mask[..., None]
    delta_s = jnp.sum(mask_ * b, axis=-3)
    delta_v_right = direction[..., None] * c
    delta_v_left = vector * a
    delta_v = jnp.sum(mask_ * (delta_v_left + delta_v_right), axis=-3)
    scalar = scalar + delta_s
    vector = vector + delta_v
    # --- update ---
    left = vector @ p["WU"]
    right = vector @ p["WV"]
    right_norm = jnp.linalg.norm(right, axis=-2, keepdims=True)
    right_concat = jnp.concatenate((scalar, right_norm), axis=-1)
    rf = _silu(right_concat @ p["Wu1"] + p["bu1"]) @ p["Wu2"] + p["bu2"]
    a2, b2, c2 = rf[..., :nf], rf[..., nf:2 * nf], rf[..., 2 * nf:]
    delta_v2 = a2 * left
    inner = jnp.sum(left * right, axis=-2, keepdims=True)
    delta_s2 = inner * b2 + c2
    return scalar + delta_s2, vector + delta_v2


if __name__ == "__main__":
    key = jax.random.PRNGKey(0)
    kp, k1, k2, k3, k4, k5 = jax.random.split(key, 6)

    N = 16
    params = init_params(kp)

    scalar = jax.random.normal(k1, (N, 1, F), jnp.float32)
    vector = jax.random.normal(k2, (N, 3, F), jnp.float32)
    expansion = jax.random.normal(k3, (N, N, E), jnp.float32)
    dvec = jax.random.normal(k4, (N, N, 3), jnp.float32)
    direction = dvec / jnp.linalg.norm(dvec, axis=-1, keepdims=True)
    mask = (jax.random.uniform(k5, (N, N, 1)) < 0.7).astype(jnp.float32)

    ref_s, ref_v = ref_forward(scalar, vector, expansion, direction, mask, params)

    # default path: bf16 storage of the O(N^2) pairwise stream (arithmetic stays f32)
    out_s, out_v = deepdf_message_and_update(
        scalar, vector, expansion, direction, mask, params)
    jax.block_until_ready((out_s, out_v))
    assert out_s.shape == (N, 1, F) and out_v.shape == (N, 3, F)
    assert jnp.allclose(out_s, ref_s, atol=2e-2, rtol=2e-2)
    assert jnp.allclose(out_v, ref_v, atol=2e-2, rtol=2e-2)

    # f32 pairwise path: bit-tighter reference check
    out_s32, out_v32 = deepdf_message_and_update(
        scalar, vector, expansion, direction, mask, params, pair_dtype=jnp.float32)
    jax.block_until_ready((out_s32, out_v32))
    assert jnp.allclose(out_s32, ref_s, atol=1e-3, rtol=1e-3)
    assert jnp.allclose(out_v32, ref_v, atol=1e-3, rtol=1e-3)

    print("KERNEL_OK")
</pallas_src>

<mosaic_0001>
module attributes {stable_mosaic.version = 11 : i64} {
  func.func @_kernel(%arg0: i32, %arg1: memref<16x32xf32, #tpu.memory_space<vmem>>, %arg2: memref<3x16x32xf32, #tpu.memory_space<vmem>>, %arg3: memref<16x128xf32, #tpu.memory_space<vmem>>, %arg4: memref<16x32xf32, #tpu.memory_space<vmem>>, %arg5: memref<256x21xbf16, #tpu.memory_space<vmem>>, %arg6: memref<3x16x16xbf16, #tpu.memory_space<vmem>>, %arg7: memref<21x128xf32, #tpu.memory_space<vmem>>, %arg8: memref<21x32xf32, #tpu.memory_space<vmem>>, %arg9: memref<32x64xf32, #tpu.memory_space<vmem>>, %arg10: memref<64x32xf32, #tpu.memory_space<vmem>>, %arg11: memref<1x32xf32, #tpu.memory_space<vmem>>, %arg12: memref<32x96xf32, #tpu.memory_space<vmem>>, %arg13: memref<1x96xf32, #tpu.memory_space<vmem>>, %arg14: memref<16x128xf32, #tpu.memory_space<vmem>>) attributes {dimension_semantics = [#tpu.dimension_semantics<parallel>], iteration_bounds = array<i64: 1>, scalar_prefetch = 0 : i64, scratch_operands = 0 : i64, tpu.core_type = #tpu.core_type<tc>, window_params = [{transform_indices = @transform_0, window_bounds = array<i64: 16, 32>}, {transform_indices = @transform_1, window_bounds = array<i64: 3, 16, 32>}, {pipeline_mode = #tpu.pipeline_mode<synchronous>, transform_indices = @transform_2, window_bounds = array<i64: 16, 128>}, {pipeline_mode = #tpu.pipeline_mode<synchronous>, transform_indices = @transform_3, window_bounds = array<i64: 16, 32>}, {transform_indices = @transform_4, window_bounds = array<i64: 256, 21>}, {transform_indices = @transform_5, window_bounds = array<i64: 3, 16, 16>}, {pipeline_mode = #tpu.pipeline_mode<synchronous>, transform_indices = @transform_6, window_bounds = array<i64: 21, 128>}, {pipeline_mode = #tpu.pipeline_mode<synchronous>, transform_indices = @transform_7, window_bounds = array<i64: 21, 32>}, {pipeline_mode = #tpu.pipeline_mode<synchronous>, transform_indices = @transform_8, window_bounds = array<i64: 32, 64>}, {pipeline_mode = #tpu.pipeline_mode<synchronous>, transform_indices = @transform_9, window_bounds = array<i64: 64, 32>}, {pipeline_mode = #tpu.pipeline_mode<synchronous>, transform_indices = @transform_10, window_bounds = array<i64: 1, 32>}, {pipeline_mode = #tpu.pipeline_mode<synchronous>, transform_indices = @transform_11, window_bounds = array<i64: 32, 96>}, {pipeline_mode = #tpu.pipeline_mode<synchronous>, transform_indices = @transform_12, window_bounds = array<i64: 1, 96>}, {transform_indices = @transform_13, window_bounds = array<i64: 16, 128>}]} {
    %c0 = arith.constant 0 : index
    %c0_0 = arith.constant 0 : index
    %0 = vector.load %arg5[%c0, %c0_0] : memref<256x21xbf16, #tpu.memory_space<vmem>>, vector<256x21xbf16>
    %1 = arith.extf %0 : vector<256x21xbf16> to vector<256x21xf32>
    %c0_1 = arith.constant 0 : index
    %c0_2 = arith.constant 0 : index
    %2 = vector.load %arg7[%c0_1, %c0_2] : memref<21x128xf32, #tpu.memory_space<vmem>>, vector<21x128xf32>
    %cst = arith.constant dense<0.000000e+00> : vector<256x128xf32>
    %3 = tpu.matmul %1, %2, %cst {dimension_numbers = #tpu.dot_dimension_numbers<[1], [0], [0], [1], [0, 0, 1, 1], [], []>} : vector<256x21xf32>, vector<21x128xf32>, vector<256x128xf32> -> vector<256x128xf32>
    %c0_3 = arith.constant 0 : index
    %c0_4 = arith.constant 0 : index
    %4 = vector.load %arg8[%c0_3, %c0_4] : memref<21x32xf32, #tpu.memory_space<vmem>>, vector<21x32xf32>
    %cst_5 = arith.constant dense<0.000000e+00> : vector<256x32xf32>
    %5 = tpu.matmul %1, %4, %cst_5 {dimension_numbers = #tpu.dot_dimension_numbers<[1], [0], [0], [1], [0, 0, 1, 1], [], []>} : vector<256x21xf32>, vector<21x32xf32>, vector<256x32xf32> -> vector<256x32xf32>
    %6 = vector.shape_cast %3 : vector<256x128xf32> to vector<16x16x128xf32>
    %c0_6 = arith.constant 0 : index
    %c0_7 = arith.constant 0 : index
    %7 = vector.load %arg3[%c0_6, %c0_7] : memref<16x128xf32, #tpu.memory_space<vmem>>, vector<16x128xf32>
    %8 = vector.shape_cast %7 : vector<16x128xf32> to vector<1x16x128xf32>
    %9 = vector.broadcast %8 : vector<1x16x128xf32> to vector<16x16x128xf32>
    %10 = arith.mulf %6, %9 : vector<16x16x128xf32>
    %cst_8 = arith.constant dense<0.000000e+00> : vector<16x128xf32>
    %11 = vector.multi_reduction <add>, %10, %cst_8 [1] : vector<16x16x128xf32> to vector<16x128xf32>
    %c0_9 = arith.constant 0 : index
    %c0_10 = arith.constant 0 : index
    %12 = vector.load %arg4[%c0_9, %c0_10] : memref<16x32xf32, #tpu.memory_space<vmem>>, vector<16x32xf32>
    %13 = vector.shape_cast %12 : vector<16x32xf32> to vector<1x16x32xf32>
    %14 = vector.shape_cast %5 : vector<256x32xf32> to vector<16x16x32xf32>
    %15 = vector.broadcast %13 : vector<1x16x32xf32> to vector<16x16x32xf32>
    %16 = arith.mulf %15, %14 : vector<16x16x32xf32>
    %c0_11 = arith.constant 0 : index
    %c0_12 = arith.constant 0 : index
    %17 = vector.load %arg1[%c0_11, %c0_12] : memref<16x32xf32, #tpu.memory_space<vmem>>, vector<16x32xf32>
    %18 = vector.extract_strided_slice %11 {offsets = [0, 96], sizes = [16, 32], strides = [1, 1]} : vector<16x128xf32> to vector<16x32xf32>
    %19 = arith.addf %17, %18 : vector<16x32xf32>
    %c0_13 = arith.constant 0 : index
    %c0_14 = arith.constant 0 : index
    %c0_15 = arith.constant 0 : index
    %20 = vector.load %arg6[%c0_13, %c0_14, %c0_15] : memref<3x16x16xbf16, #tpu.memory_space<vmem>>, vector<1x16x16xbf16>
    %21 = vector.shape_cast %20 : vector<1x16x16xbf16> to vector<16x16xbf16>
    %22 = arith.extf %21 : vector<16x16xbf16> to vector<16x16xf32>
    %23 = vector.shape_cast %22 : vector<16x16xf32> to vector<16x16x1xf32>
    %24 = vector.broadcast %23 : vector<16x16x1xf32> to vector<16x16x32xf32>
    %25 = arith.mulf %24, %16 : vector<16x16x32xf32>
    %cst_16 = arith.constant dense<0.000000e+00> : vector<16x32xf32>
    %26 = vector.multi_reduction <add>, %25, %cst_16 [1] : vector<16x16x32xf32> to vector<16x32xf32>
    %c0_17 = arith.constant 0 : index
    %c0_18 = arith.constant 0 : index
    %c0_19 = arith.constant 0 : index
    %27 = vector.load %arg2[%c0_17, %c0_18, %c0_19] : memref<3x16x32xf32, #tpu.memory_space<vmem>>, vector<1x16x32xf32>
    %28 = vector.shape_cast %27 : vector<1x16x32xf32> to vector<16x32xf32>
    %29 = vector.extract_strided_slice %11 {offsets = [0, 0], sizes = [16, 32], strides = [1, 1]} : vector<16x128xf32> to vector<16x32xf32>
    %30 = arith.addf %28, %29 : vector<16x32xf32>
    %31 = arith.addf %30, %26 : vector<16x32xf32>
    %c1 = arith.constant 1 : index
    %c0_20 = arith.constant 0 : index
    %c0_21 = arith.constant 0 : index
    %32 = vector.load %arg6[%c1, %c0_20, %c0_21] : memref<3x16x16xbf16, #tpu.memory_space<vmem>>, vector<1x16x16xbf16>
    %33 = vector.shape_cast %32 : vector<1x16x16xbf16> to vector<16x16xbf16>
    %34 = arith.extf %33 : vector<16x16xbf16> to vector<16x16xf32>
    %35 = vector.shape_cast %34 : vector<16x16xf32> to vector<16x16x1xf32>
    %36 = vector.broadcast %35 : vector<16x16x1xf32> to vector<16x16x32xf32>
    %37 = arith.mulf %36, %16 : vector<16x16x32xf32>
    %cst_22 = arith.constant dense<0.000000e+00> : vector<16x32xf32>
    %38 = vector.multi_reduction <add>, %37, %cst_22 [1] : vector<16x16x32xf32> to vector<16x32xf32>
    %c1_23 = arith.constant 1 : index
    %c0_24 = arith.constant 0 : index
    %c0_25 = arith.constant 0 : index
    %39 = vector.load %arg2[%c1_23, %c0_24, %c0_25] : memref<3x16x32xf32, #tpu.memory_space<vmem>>, vector<1x16x32xf32>
    %40 = vector.shape_cast %39 : vector<1x16x32xf32> to vector<16x32xf32>
    %41 = vector.extract_strided_slice %11 {offsets = [0, 32], sizes = [16, 32], strides = [1, 1]} : vector<16x128xf32> to vector<16x32xf32>
    %42 = arith.addf %40, %41 : vector<16x32xf32>
    %43 = arith.addf %42, %38 : vector<16x32xf32>
    %c2 = arith.constant 2 : index
    %c0_26 = arith.constant 0 : index
    %c0_27 = arith.constant 0 : index
    %44 = vector.load %arg6[%c2, %c0_26, %c0_27] : memref<3x16x16xbf16, #tpu.memory_space<vmem>>, vector<1x16x16xbf16>
    %45 = vector.shape_cast %44 : vector<1x16x16xbf16> to vector<16x16xbf16>
    %46 = arith.extf %45 : vector<16x16xbf16> to vector<16x16xf32>
    %47 = vector.shape_cast %46 : vector<16x16xf32> to vector<16x16x1xf32>
    %48 = vector.broadcast %47 : vector<16x16x1xf32> to vector<16x16x32xf32>
    %49 = arith.mulf %48, %16 : vector<16x16x32xf32>
    %cst_28 = arith.constant dense<0.000000e+00> : vector<16x32xf32>
    %50 = vector.multi_reduction <add>, %49, %cst_28 [1] : vector<16x16x32xf32> to vector<16x32xf32>
    %c2_29 = arith.constant 2 : index
    %c0_30 = arith.constant 0 : index
    %c0_31 = arith.constant 0 : index
    %51 = vector.load %arg2[%c2_29, %c0_30, %c0_31] : memref<3x16x32xf32, #tpu.memory_space<vmem>>, vector<1x16x32xf32>
    %52 = vector.shape_cast %51 : vector<1x16x32xf32> to vector<16x32xf32>
    %53 = vector.extract_strided_slice %11 {offsets = [0, 64], sizes = [16, 32], strides = [1, 1]} : vector<16x128xf32> to vector<16x32xf32>
    %54 = arith.addf %52, %53 : vector<16x32xf32>
    %55 = arith.addf %54, %50 : vector<16x32xf32>
    %56 = tpu.concatenate %31, %43, %55 in 0 : vector<16x32xf32>, vector<16x32xf32>, vector<16x32xf32> -> vector<48x32xf32>
    %c0_32 = arith.constant 0 : index
    %c0_33 = arith.constant 0 : index
    %57 = vector.load %arg9[%c0_32, %c0_33] : memref<32x64xf32, #tpu.memory_space<vmem>>, vector<32x64xf32>
    %cst_34 = arith.constant dense<0.000000e+00> : vector<48x64xf32>
    %58 = tpu.matmul %56, %57, %cst_34 {dimension_numbers = #tpu.dot_dimension_numbers<[1], [0], [0], [1], [0, 0, 1, 1], [], []>} : vector<48x32xf32>, vector<32x64xf32>, vector<48x64xf32> -> vector<48x64xf32>
    %59 = vector.extract_strided_slice %58 {offsets = [0, 0], sizes = [16, 32], strides = [1, 1]} : vector<48x64xf32> to vector<16x32xf32>
    %60 = vector.extract_strided_slice %58 {offsets = [16, 0], sizes = [16, 32], strides = [1, 1]} : vector<48x64xf32> to vector<16x32xf32>
    %61 = vector.extract_strided_slice %58 {offsets = [32, 0], sizes = [16, 32], strides = [1, 1]} : vector<48x64xf32> to vector<16x32xf32>
    %62 = vector.extract_strided_slice %58 {offsets = [0, 32], sizes = [16, 32], strides = [1, 1]} : vector<48x64xf32> to vector<16x32xf32>
    %63 = vector.extract_strided_slice %58 {offsets = [16, 32], sizes = [16, 32], strides = [1, 1]} : vector<48x64xf32> to vector<16x32xf32>
    %64 = vector.extract_strided_slice %58 {offsets = [32, 32], sizes = [16, 32], strides = [1, 1]} : vector<48x64xf32> to vector<16x32xf32>
    %65 = arith.mulf %62, %62 : vector<16x32xf32>
    %66 = arith.mulf %63, %63 : vector<16x32xf32>
    %67 = arith.addf %65, %66 : vector<16x32xf32>
    %68 = arith.mulf %64, %64 : vector<16x32xf32>
    %69 = arith.addf %67, %68 : vector<16x32xf32>
    %70 = math.sqrt %69 : vector<16x32xf32>
    %71 = arith.mulf %59, %62 : vector<16x32xf32>
    %72 = arith.mulf %60, %63 : vector<16x32xf32>
    %73 = arith.addf %71, %72 : vector<16x32xf32>
    %74 = arith.mulf %61, %64 : vector<16x32xf32>
    %75 = arith.addf %73, %74 : vector<16x32xf32>
    %76 = tpu.concatenate %19, %70 in 1 : vector<16x32xf32>, vector<16x32xf32> -> vector<16x64xf32>
    %c0_35 = arith.constant 0 : index
    %c0_36 = arith.constant 0 : index
    %77 = vector.load %arg10[%c0_35, %c0_36] : memref<64x32xf32, #tpu.memory_space<vmem>>, vector<64x32xf32>
    %cst_37 = arith.constant dense<0.000000e+00> : vector<16x32xf32>
    %78 = tpu.matmul %76, %77, %cst_37 {dimension_numbers = #tpu.dot_dimension_numbers<[1], [0], [0], [1], [0, 0, 1, 1], [], []>} : vector<16x64xf32>, vector<64x32xf32>, vector<16x32xf32> -> vector<16x32xf32>
    %c0_38 = arith.constant 0 : index
    %c0_39 = arith.constant 0 : index
    %79 = vector.load %arg11[%c0_38, %c0_39] : memref<1x32xf32, #tpu.memory_space<vmem>>, vector<1x32xf32>
    %80 = vector.broadcast %79 : vector<1x32xf32> to vector<16x32xf32>
    %81 = arith.addf %78, %80 : vector<16x32xf32>
    %82 = arith.negf %81 : vector<16x32xf32>
    %83 = math.exp %82 : vector<16x32xf32>
    %cst_40 = arith.constant 1.000000e+00 : f32
    %84 = vector.broadcast %cst_40 : f32 to vector<16x32xf32>
    %85 = arith.addf %84, %83 : vector<16x32xf32>
    %86 = arith.divf %84, %85 : vector<16x32xf32>
    %87 = arith.mulf %81, %86 : vector<16x32xf32>
    %c0_41 = arith.constant 0 : index
    %c0_42 = arith.constant 0 : index
    %88 = vector.load %arg12[%c0_41, %c0_42] : memref<32x96xf32, #tpu.memory_space<vmem>>, vector<32x96xf32>
    %cst_43 = arith.constant dense<0.000000e+00> : vector<16x96xf32>
    %89 = tpu.matmul %87, %88, %cst_43 {dimension_numbers = #tpu.dot_dimension_numbers<[1], [0], [0], [1], [0, 0, 1, 1], [], []>} : vector<16x32xf32>, vector<32x96xf32>, vector<16x96xf32> -> vector<16x96xf32>
    %c0_44 = arith.constant 0 : index
    %c0_45 = arith.constant 0 : index
    %90 = vector.load %arg13[%c0_44, %c0_45] : memref<1x96xf32, #tpu.memory_space<vmem>>, vector<1x96xf32>
    %91 = vector.broadcast %90 : vector<1x96xf32> to vector<16x96xf32>
    %92 = arith.addf %89, %91 : vector<16x96xf32>
    %93 = vector.extract_strided_slice %92 {offsets = [0, 0], sizes = [16, 32], strides = [1, 1]} : vector<16x96xf32> to vector<16x32xf32>
    %94 = vector.extract_strided_slice %92 {offsets = [0, 32], sizes = [16, 32], strides = [1, 1]} : vector<16x96xf32> to vector<16x32xf32>
    %95 = vector.extract_strided_slice %92 {offsets = [0, 64], sizes = [16, 32], strides = [1, 1]} : vector<16x96xf32> to vector<16x32xf32>
    %96 = arith.mulf %75, %94 : vector<16x32xf32>
    %97 = arith.addf %19, %96 : vector<16x32xf32>
    %98 = arith.addf %97, %95 : vector<16x32xf32>
    %99 = arith.mulf %93, %59 : vector<16x32xf32>
    %100 = arith.addf %31, %99 : vector<16x32xf32>
    %101 = arith.mulf %93, %60 : vector<16x32xf32>
    %102 = arith.addf %43, %101 : vector<16x32xf32>
    %103 = arith.mulf %93, %61 : vector<16x32xf32>
    %104 = arith.addf %55, %103 : vector<16x32xf32>
    %105 = tpu.concatenate %98, %100, %102, %104 in 1 : vector<16x32xf32>, vector<16x32xf32>, vector<16x32xf32>, vector<16x32xf32> -> vector<16x128xf32>
    %c0_46 = arith.constant 0 : index
    %c0_47 = arith.constant 0 : index
    %106 = vector.load %arg14[%c0_46, %c0_47] : memref<16x128xf32, #tpu.memory_space<vmem>>, vector<16x128xf32>
    tpu.vector_store %arg14[%c0_46, %c0_47], %105 {strides = array<i32>} : memref<16x128xf32, #tpu.memory_space<vmem>>, vector<16x128xf32>,
    return
  }
  func.func @transform_0(%arg0: i32) -> (i32, i32) {
    %c0_i32 = arith.constant 0 : i32
    %c0_i32_0 = arith.constant 0 : i32
    return %arg0, %c0_i32 : i32, i32
  }
  func.func @transform_1(%arg0: i32) -> (i32, i32, i32) {
    %c0_i32 = arith.constant 0 : i32
    %c0_i32_0 = arith.constant 0 : i32
    %c0_i32_1 = arith.constant 0 : i32
    return %c0_i32, %arg0, %c0_i32_0 : i32, i32, i32
  }
  func.func @transform_2(%arg0: i32) -> (i32, i32) {
    %c0_i32 = arith.constant 0 : i32
    %c0_i32_0 = arith.constant 0 : i32
    %c0_i32_1 = arith.constant 0 : i32
    return %c0_i32, %c0_i32_0 : i32, i32
  }
  func.func @transform_3(%arg0: i32) -> (i32, i32) {
    %c0_i32 = arith.constant 0 : i32
    %c0_i32_0 = arith.constant 0 : i32
    %c0_i32_1 = arith.constant 0 : i32
    return %c0_i32, %c0_i32_0 : i32, i32
  }
  func.func @transform_4(%arg0: i32) -> (i32, i32) {
    %c0_i32 = arith.constant 0 : i32
    %c0_i32_0 = arith.constant 0 : i32
    return %arg0, %c0_i32 : i32, i32
  }
  func.func @transform_5(%arg0: i32) -> (i32, i32, i32) {
    %c0_i32 = arith.constant 0 : i32
    %c0_i32_0 = arith.constant 0 : i32
    %c0_i32_1 = arith.constant 0 : i32
    return %c0_i32, %arg0, %c0_i32_0 : i32, i32, i32
  }
  func.func @transform_6(%arg0: i32) -> (i32, i32) {
    %c0_i32 = arith.constant 0 : i32
    %c0_i32_0 = arith.constant 0 : i32
    %c0_i32_1 = arith.constant 0 : i32
    return %c0_i32, %c0_i32_0 : i32, i32
  }
  func.func @transform_7(%arg0: i32) -> (i32, i32) {
    %c0_i32 = arith.constant 0 : i32
    %c0_i32_0 = arith.constant 0 : i32
    %c0_i32_1 = arith.constant 0 : i32
    return %c0_i32, %c0_i32_0 : i32, i32
  }
  func.func @transform_8(%arg0: i32) -> (i32, i32) {
    %c0_i32 = arith.constant 0 : i32
    %c0_i32_0 = arith.constant 0 : i32
    %c0_i32_1 = arith.constant 0 : i32
    return %c0_i32, %c0_i32_0 : i32, i32
  }
  func.func @transform_9(%arg0: i32) -> (i32, i32) {
    %c0_i32 = arith.constant 0 : i32
    %c0_i32_0 = arith.constant 0 : i32
    %c0_i32_1 = arith.constant 0 : i32
    return %c0_i32, %c0_i32_0 : i32, i32
  }
  func.func @transform_10(%arg0: i32) -> (i32, i32) {
    %c0_i32 = arith.constant 0 : i32
    %c0_i32_0 = arith.constant 0 : i32
    %c0_i32_1 = arith.constant 0 : i32
    return %c0_i32, %c0_i32_0 : i32, i32
  }
  func.func @transform_11(%arg0: i32) -> (i32, i32) {
    %c0_i32 = arith.constant 0 : i32
    %c0_i32_0 = arith.constant 0 : i32
    %c0_i32_1 = arith.constant 0 : i32
    return %c0_i32, %c0_i32_0 : i32, i32
  }
  func.func @transform_12(%arg0: i32) -> (i32, i32) {
    %c0_i32 = arith.constant 0 : i32
    %c0_i32_0 = arith.constant 0 : i32
    %c0_i32_1 = arith.constant 0 : i32
    return %c0_i32, %c0_i32_0 : i32, i32
  }
  func.func @transform_13(%arg0: i32) -> (i32, i32) {
    %c0_i32 = arith.constant 0 : i32
    %c0_i32_0 = arith.constant 0 : i32
    return %arg0, %c0_i32 : i32, i32
  }
}

</mosaic_0001>

<llo_original>
// kernel: tpu_custom_call.1
$region0: #{tpu_custom_call.1}
  #allocation0 [shape = 'u32[]', space=smem, size = 0x4, offset = 0x4, fixed_abs, tag = 'smem constant byte address 0x4 - core index']
  #allocation1 [shape = 'u32[144,128]{1,0:T(1,128)}', space=vmem, size = 0x12000, scoped, tag = 'internal scratch']
  %s0 = inlined_call_operand.vmem [shape: f32[16,32], index: 0, kind: input, shape index: {}]
  %s1 = inlined_call_operand.vmem [shape: f32[3,16,32], index: 1, kind: input, shape index: {}]
  %s2 = inlined_call_operand.vmem [shape: f32[16,128], index: 2, kind: input, shape index: {}]
  %s3 = inlined_call_operand.hbm [shape: f32[16,32], index: 3, kind: input, shape index: {}]
  %s4 = inlined_call_operand.vmem [shape: bf16[256,21], index: 4, kind: input, shape index: {}]
  %s5 = inlined_call_operand.vmem [shape: bf16[3,16,16], index: 5, kind: input, shape index: {}]
  %s6 = inlined_call_operand.vmem [shape: f32[21,128], index: 6, kind: input, shape index: {}]
  %s7 = inlined_call_operand.vmem [shape: f32[21,32], index: 7, kind: input, shape index: {}]
  %s8 = inlined_call_operand.vmem [shape: f32[32,64], index: 8, kind: input, shape index: {}]
  %s9 = inlined_call_operand.vmem [shape: f32[64,32], index: 9, kind: input, shape index: {}]
  %s10 = inlined_call_operand.vmem [shape: f32[1,32], index: 10, kind: input, shape index: {}]
  %s11 = inlined_call_operand.vmem [shape: f32[32,96], index: 11, kind: input, shape index: {}]
  %s12 = inlined_call_operand.vmem [shape: f32[1,96], index: 12, kind: input, shape index: {}]
  %s13 = inlined_call_operand.hbm [shape: f32[16,128], index: 13, kind: output, shape index: {}]
  %s14 = sld [smem:[#allocation0]]
  $region66: #{tpu_custom_call.1} parent=0
    _
  %s16 = ssub.s32 1, %s14
  %s17 = scalar_select 0, %s16, %s14
  $region1: #{tpu_custom_call.1} parent=0
    #allocation2 [shape = 'u8[8192]{0}', space=vmem, size = 0x2000, scoped, tag = 'input window, operand 3, single buffered']
    #allocation3 [shape = 's32[1]{0}', space=sflag, size = 0x4, scoped, tag = 'scoped memory for tpu_custom_call.1']
    #allocation4 [shape = 's32[1]{0}', space=sflag, size = 0x4, scoped, tag = 'scoped memory for tpu_custom_call.1']
    #allocation5 [shape = 'u8[8192]{0}', space=vmem, size = 0x2000, scoped, tag = 'output window, operand 0, single buffered']
    %18 = vsyncpa [#allocation3], 0
    %19 = vsyncpa [#allocation4], 0
    // Predicated region
    $region2: #{tpu_custom_call.1} parent=1 // pred_check
      _
    $region3: #{tpu_custom_call.1} parent=1 // pred_check_branch
      %21 = sbr.rel (0) target = $region5
    $region4: #{tpu_custom_call.1} parent=1 // pred_region
      _
    $region5: #{tpu_custom_call.1} parent=1 // pred_fallthru
      _
    // Predicated region
    $region6: #{tpu_custom_call.1} parent=1 // pred_check
      _
    $region7: #{tpu_custom_call.1} parent=1 // pred_check_branch
      %23 = sbr.rel (0) target = $region9
    $region8: #{tpu_custom_call.1} parent=1 // pred_region
      _
    $region9: #{tpu_custom_call.1} parent=1 // pred_fallthru
      _
    // Predicated region
    $region10: #{tpu_custom_call.1} parent=1 // pred_check
      _
    $region11: #{tpu_custom_call.1} parent=1 // pred_check_branch
      %25 = sbr.rel (0) target = $region13
    $region12: #{tpu_custom_call.1} parent=1 // pred_region
      _
    $region13: #{tpu_custom_call.1} parent=1 // pred_fallthru
      _
    // Predicated region
    $region14: #{tpu_custom_call.1} parent=1 // pred_check
      _
    $region15: #{tpu_custom_call.1} parent=1 // pred_check_branch
      %27 = sbr.rel (0) target = $region17
    $region16: #{tpu_custom_call.1} parent=1 // pred_region
      %s29 = ssub.s32 256, 256
      %30 = vsyncadd [#allocation3], %s29
      %s31 = sshll.u32 [#allocation2], 4
      %s32 = int_to_ptr.vmem [resolvable:$true] %s31
      %37 = dma.hbm_to_vmem [thread:$0]  %s3, 256, %s32, [#allocation3], 128, 128, 8
    $region17: #{tpu_custom_call.1} parent=1 // pred_fallthru
      _
    // Predicated region
    $region18: #{tpu_custom_call.1} parent=1 // pred_check
      _
    $region19: #{tpu_custom_call.1} parent=1 // pred_check_branch
      %39 = sbr.rel (0) target = $region21
    $region20: #{tpu_custom_call.1} parent=1 // pred_region
      _
    $region21: #{tpu_custom_call.1} parent=1 // pred_fallthru
      _
    // Predicated region
    $region22: #{tpu_custom_call.1} parent=1 // pred_check
      _
    $region23: #{tpu_custom_call.1} parent=1 // pred_check_branch
      %41 = sbr.rel (0) target = $region25
    $region24: #{tpu_custom_call.1} parent=1 // pred_region
      _
    $region25: #{tpu_custom_call.1} parent=1 // pred_fallthru
      _
    // Predicated region
    $region26: #{tpu_custom_call.1} parent=1 // pred_check
      _
    $region27: #{tpu_custom_call.1} parent=1 // pred_check_branch
      %43 = sbr.rel (0) target = $region29
    $region28: #{tpu_custom_call.1} parent=1 // pred_region
      _
    $region29: #{tpu_custom_call.1} parent=1 // pred_fallthru
      _
    // Predicated region
    $region30: #{tpu_custom_call.1} parent=1 // pred_check
      _
    $region31: #{tpu_custom_call.1} parent=1 // pred_check_branch
      %45 = sbr.rel (0) target = $region33
    $region32: #{tpu_custom_call.1} parent=1 // pred_region
      _
    $region33: #{tpu_custom_call.1} parent=1 // pred_fallthru
      _
    // Predicated region
    $region34: #{tpu_custom_call.1} parent=1 // pred_check
      _
    $region35: #{tpu_custom_call.1} parent=1 // pred_check_branch
      %47 = sbr.rel (0) target = $region37
    $region36: #{tpu_custom_call.1} parent=1 // pred_region
      _
    $region37: #{tpu_custom_call.1} parent=1 // pred_fallthru
      _
    // Predicated region
    $region38: #{tpu_custom_call.1} parent=1 // pred_check
      _
    $region39: #{tpu_custom_call.1} parent=1 // pred_check_branch
      %49 = sbr.rel (0) target = $region41
    $region40: #{tpu_custom_call.1} parent=1 // pred_region
      _
    $region41: #{tpu_custom_call.1} parent=1 // pred_fallthru
      _
    // Predicated region
    $region42: #{tpu_custom_call.1} parent=1 // pred_check
      _
    $region43: #{tpu_custom_call.1} parent=1 // pred_check_branch
      %51 = sbr.rel (0) target = $region45
    $region44: #{tpu_custom_call.1} parent=1 // pred_region
      _
    $region45: #{tpu_custom_call.1} parent=1 // pred_fallthru
      _
    // Predicated region
    $region46: #{tpu_custom_call.1} parent=1 // pred_check
      _
    $region47: #{tpu_custom_call.1} parent=1 // pred_check_branch
      %53 = sbr.rel (0) target = $region49
    $region48: #{tpu_custom_call.1} parent=1 // pred_region
      _
    $region49: #{tpu_custom_call.1} parent=1 // pred_fallthru
      _
    // Predicated region
    $region50: #{tpu_custom_call.1} parent=1 // pred_check
      _
    $region51: #{tpu_custom_call.1} parent=1 // pred_check_branch
      %55 = sbr.rel (0) target = $region53
    $region52: #{tpu_custom_call.1} parent=1 // pred_region
      _
    $region53: #{tpu_custom_call.1} parent=1 // pred_fallthru
      _
    // Predicated region
    $region54: #{tpu_custom_call.1} parent=1 // pred_check
      _
    $region55: #{tpu_custom_call.1} parent=1 // pred_check_branch
      %57 = sbr.rel (0) target = $region57
    $region56: #{tpu_custom_call.1} parent=1 // pred_region
      %58 = dma.done [#allocation3], 256
    $region57: #{tpu_custom_call.1} parent=1 // pred_fallthru
      _
    %v59 = vld [vmem:[%s4] sm:$0xf]
    %v60 = vld [vmem:[%s4 + $0x4] sm:$0xf]
    %v61 = vld [vmem:[%s4 + $0x8] sm:$0xf]
    %v62 = vld [vmem:[%s4 + $0xc] sm:$0xf]
    %v63 = vld [vmem:[%s4 + $0x10] sm:$0xf]
    %v64 = vld [vmem:[%s4 + $0x14] sm:$0xf]
    %v65 = vld [vmem:[%s4 + $0x18] sm:$0xf]
    %v66 = vld [vmem:[%s4 + $0x1c] sm:$0xf]
    %v67 = vld [vmem:[%s4 + $0x20] sm:$0xf]
    %v68 = vld [vmem:[%s4 + $0x24] sm:$0xf]
    %v69 = vld [vmem:[%s4 + $0x28] sm:$0xf]
    %v70 = vld [vmem:[%s4 + $0x2c] sm:$0xf]
    %v71 = vld [vmem:[%s4 + $0x30] sm:$0xf]
    %v72 = vld [vmem:[%s4 + $0x34] sm:$0xf]
    %v73 = vld [vmem:[%s4 + $0x38] sm:$0xf]
    %v74 = vld [vmem:[%s4 + $0x3c] sm:$0xf]
    %v75 = vld [vmem:[%s4 + $0x40] sm:$0xf]
    %v76 = vld [vmem:[%s4 + $0x44] sm:$0xf]
    %v77 = vld [vmem:[%s4 + $0x48] sm:$0xf]
    %v78 = vld [vmem:[%s4 + $0x4c] sm:$0xf]
    %v79 = vld [vmem:[%s4 + $0x50] sm:$0xf]
    %v80 = vld [vmem:[%s4 + $0x54] sm:$0xf]
    %v81 = vld [vmem:[%s4 + $0x58] sm:$0xf]
    %v82 = vld [vmem:[%s4 + $0x5c] sm:$0xf]
    %v83 = vld [vmem:[%s4 + $0x60] sm:$0xf]
    %v84 = vld [vmem:[%s4 + $0x64] sm:$0xf]
    %v85 = vld [vmem:[%s4 + $0x68] sm:$0xf]
    %v86 = vld [vmem:[%s4 + $0x6c] sm:$0xf]
    %v87 = vld [vmem:[%s4 + $0x70] sm:$0xf]
    %v88 = vld [vmem:[%s4 + $0x74] sm:$0xf]
    %v89 = vld [vmem:[%s4 + $0x78] sm:$0xf]
    %v90 = vld [vmem:[%s4 + $0x7c] sm:$0xf]
    %v91 = vunpack.c.l.bf16 %v59
    %v92 = vunpack.c.l.bf16 %v60
    %v93 = vunpack.c.l.bf16 %v61
    %v94 = vunpack.c.l.bf16 %v62
    %v95 = vunpack.c.l.bf16 %v63
    %v96 = vunpack.c.l.bf16 %v64
    %v97 = vunpack.c.l.bf16 %v65
    %v98 = vunpack.c.l.bf16 %v66
    %v99 = vunpack.c.l.bf16 %v67
    %v100 = vunpack.c.l.bf16 %v68
    %v101 = vunpack.c.l.bf16 %v69
    %v102 = vunpack.c.l.bf16 %v70
    %v103 = vunpack.c.l.bf16 %v71
    %v104 = vunpack.c.l.bf16 %v72
    %v105 = vunpack.c.l.bf16 %v73
    %v106 = vunpack.c.l.bf16 %v74
    %v107 = vunpack.c.l.bf16 %v75
    %v108 = vunpack.c.l.bf16 %v76
    %v109 = vunpack.c.l.bf16 %v77
    %v110 = vunpack.c.l.bf16 %v78
    %v111 = vunpack.c.l.bf16 %v79
    %v112 = vunpack.c.l.bf16 %v80
    %v113 = vunpack.c.l.bf16 %v81
    %v114 = vunpack.c.l.bf16 %v82
    %v115 = vunpack.c.l.bf16 %v83
    %v116 = vunpack.c.l.bf16 %v84
    %v117 = vunpack.c.l.bf16 %v85
    %v118 = vunpack.c.l.bf16 %v86
    %v119 = vunpack.c.l.bf16 %v87
    %v120 = vunpack.c.l.bf16 %v88
    %v121 = vunpack.c.l.bf16 %v89
    %v122 = vunpack.c.l.bf16 %v90
    %v123 = vld [vmem:[%s6] sm:$0xff]
    %v124 = vld [vmem:[%s6 + $0x8] sm:$0xff]
    %v125 = vld [vmem:[%s6 + $0x10] sm:$0x1f]
    %vm126 = vcmask 171008
    %v128 = vsel %vm126, %v91, 0
    %v131 = vsel %vm126, %v92, 0
    %v134 = vsel %vm126, %v93, 0
    %v137 = vsel %vm126, %v94, 0
    %v140 = vsel %vm126, %v95, 0
    %v143 = vsel %vm126, %v96, 0
    %v146 = vsel %vm126, %v97, 0
    %v149 = vsel %vm126, %v98, 0
    %v152 = vsel %vm126, %v99, 0
    %v155 = vsel %vm126, %v100, 0
    %v158 = vsel %vm126, %v101, 0
    %v161 = vsel %vm126, %v102, 0
    %v164 = vsel %vm126, %v103, 0
    %v167 = vsel %vm126, %v104, 0
    %v170 = vsel %vm126, %v105, 0
    %v173 = vsel %vm126, %v106, 0
    %v176 = vsel %vm126, %v107, 0
    %v179 = vsel %vm126, %v108, 0
    %v182 = vsel %vm126, %v109, 0
    %v185 = vsel %vm126, %v110, 0
    %v188 = vsel %vm126, %v111, 0
    %v191 = vsel %vm126, %v112, 0
    %v194 = vsel %vm126, %v113, 0
    %v197 = vsel %vm126, %v114, 0
    %v200 = vsel %vm126, %v115, 0
    %v203 = vsel %vm126, %v116, 0
    %v206 = vsel %vm126, %v117, 0
    %v209 = vsel %vm126, %v118, 0
    %v212 = vsel %vm126, %v119, 0
    %v215 = vsel %vm126, %v120, 0
    %v218 = vsel %vm126, %v121, 0
    %v221 = vsel %vm126, %v122, 0
    %vm223 = vcmask 1044480
    %v225 = vsel %vm223, %v125, 0
    %227 = vmatprep.subr.mxu0 0.0
    %228 = vmatpush1.msra.mxu0 0.0
    %229 = vmatprep.subr.mxu0 0.0
    %230 = vmatpush1.msra.mxu0 0.0
    %231 = vmatprep.subr.mxu0 0.0
    %232 = vmatpush1.msra.mxu0 0.0
    %233 = vmatprep.subr.mxu0 0.0
    %234 = vmatpush1.msra.mxu0 0.0
    %235 = vmatprep.subr.mxu0 0.0
    %236 = vmatpush1.msra.mxu0 0.0
    %237 = vmatprep.subr.mxu0 0.0
    %238 = vmatpush1.msra.mxu0 0.0
    %239 = vmatprep.subr.mxu0 0.0
    %240 = vmatpush1.msra.mxu0 0.0
    %241 = vmatprep.subr.mxu0 0.0
    %242 = vmatpush1.msra.mxu0 0.0
    %243 = vmatprep.subr.mxu0 0.0
    %244 = vmatpush1.msra.mxu0 0.0
    %245 = vmatprep.subr.mxu0 0.0
    %246 = vmatpush1.msra.mxu0 0.0
    %247 = vmatprep.subr.mxu0 0.0
    %248 = vmatpush1.msra.mxu0 0.0
    %249 = vmatprep.subr.mxu0 0.0
    %250 = vmatpush1.msra.mxu0 0.0
    %251 = vmatprep.subr.mxu0 0.0
    %252 = vmatpush1.msra.mxu0 0.0
    %253 = vmatprep.subr.mxu0 0.0
    %254 = vmatpush1.msra.mxu0 %v225
    %255 = vmatprep.subr.mxu0 0.0
    %256 = vmatpush1.msra.mxu0 %v124
    %257 = vmatprep.subr.mxu0 0.0
    %258 = vmatpush1.msra.mxu0 %v123
    %259 = vmatprep.subr.mxu0 0.0
    %260 = vmatpush2.msra.mxu0 0.0
    %261 = vmatprep.subr.mxu0 0.0
    %262 = vmatpush2.msra.mxu0 0.0
    %263 = vmatprep.subr.mxu0 0.0
    %264 = vmatpush2.msra.mxu0 0.0
    %265 = vmatprep.subr.mxu0 0.0
    %266 = vmatpush2.msra.mxu0 0.0
    %267 = vmatprep.subr.mxu0 0.0
    %268 = vmatpush2.msra.mxu0 0.0
    %269 = vmatprep.subr.mxu0 0.0
    %270 = vmatpush2.msra.mxu0 0.0
    %271 = vmatprep.subr.mxu0 0.0
    %272 = vmatpush2.msra.mxu0 0.0
    %273 = vmatprep.subr.mxu0 0.0
    %274 = vmatpush2.msra.mxu0 0.0
    %275 = vmatprep.subr.mxu0 0.0
    %276 = vmatpush2.msra.mxu0 0.0
    %277 = vmatprep.subr.mxu0 0.0
    %278 = vmatpush2.msra.mxu0 0.0
    %279 = vmatprep.subr.mxu0 0.0
    %280 = vmatpush2.msra.mxu0 0.0
    %281 = vmatprep.subr.mxu0 0.0
    %282 = vmatpush2.msra.mxu0 0.0
    %283 = vmatprep.subr.mxu0 0.0
    %284 = vmatpush2.msra.mxu0 0.0
    %285 = vmatprep.subr.mxu0 0.0
    %286 = vmatpush2.msra.mxu0 0.0
    %287 = vmatprep.subr.mxu0 0.0
    %288 = vmatpush2.msra.mxu0 0.0
    %289 = vmatprep.subr.mxu0 0.0
    %290 = vmatpush2.msra.mxu0 0.0
    %291 = vmatprep.mubr.f32.mxu0 0.0
    %292 = vmatmul.mubr.f32.gmra.mxu0 %v128
    %v293 = vpop.f32.mrf.mxu0
    %v294 = vadd.f32 0.0, %v293
    %v295 = vpop.f32.mrf.mxu0
    %296 = vmatprep.mubr.f32.mxu0 0.0
    %297 = vmatmul.mubr.f32.gmra.mxu0 %v131
    %v298 = vpop.f32.mrf.mxu0
    %v299 = vadd.f32 0.0, %v298
    %v300 = vpop.f32.mrf.mxu0
    %301 = vmatprep.mubr.f32.mxu0 0.0
    %302 = vmatmul.mubr.f32.gmra.mxu0 %v134
    %v303 = vpop.f32.mrf.mxu0
    %v304 = vadd.f32 0.0, %v303
    %v305 = vpop.f32.mrf.mxu0
    %306 = vmatprep.mubr.f32.mxu0 0.0
    %307 = vmatmul.mubr.f32.gmra.mxu0 %v137
    %v308 = vpop.f32.mrf.mxu0
    %v309 = vadd.f32 0.0, %v308
    %v310 = vpop.f32.mrf.mxu0
    %311 = vmatprep.mubr.f32.mxu0 0.0
    %312 = vmatmul.mubr.f32.gmra.mxu0 %v140
    %v313 = vpop.f32.mrf.mxu0
    %v314 = vadd.f32 0.0, %v313
    %v315 = vpop.f32.mrf.mxu0
    %316 = vmatprep.mubr.f32.mxu0 0.0
    %317 = vmatmul.mubr.f32.gmra.mxu0 %v143
    %v318 = vpop.f32.mrf.mxu0
    %v319 = vadd.f32 0.0, %v318
    %v320 = vpop.f32.mrf.mxu0
    %321 = vmatprep.mubr.f32.mxu0 0.0
    %322 = vmatmul.mubr.f32.gmra.mxu0 %v146
    %v323 = vpop.f32.mrf.mxu0
    %v324 = vadd.f32 0.0, %v323
    %v325 = vpop.f32.mrf.mxu0
    %326 = vmatprep.mubr.f32.mxu0 0.0
    %327 = vmatmul.mubr.f32.gmra.mxu0 %v149
    %v328 = vpop.f32.mrf.mxu0
    %v329 = vadd.f32 0.0, %v328
    %v330 = vpop.f32.mrf.mxu0
    %331 = vmatprep.mubr.f32.mxu0 0.0
    %332 = vmatmul.mubr.f32.gmra.mxu0 %v152
    %v333 = vpop.f32.mrf.mxu0
    %v334 = vadd.f32 0.0, %v333
    %v335 = vpop.f32.mrf.mxu0
    %336 = vmatprep.mubr.f32.mxu0 0.0
    %337 = vmatmul.mubr.f32.gmra.mxu0 %v155
    %v338 = vpop.f32.mrf.mxu0
    %v339 = vadd.f32 0.0, %v338
    %v340 = vpop.f32.mrf.mxu0
    %341 = vmatprep.mubr.f32.mxu0 0.0
    %342 = vmatmul.mubr.f32.gmra.mxu0 %v158
    %v343 = vpop.f32.mrf.mxu0
    %v344 = vadd.f32 0.0, %v343
    %v345 = vpop.f32.mrf.mxu0
    %346 = vmatprep.mubr.f32.mxu0 0.0
    %347 = vmatmul.mubr.f32.gmra.mxu0 %v161
    %v348 = vpop.f32.mrf.mxu0
    %v349 = vadd.f32 0.0, %v348
    %v350 = vpop.f32.mrf.mxu0
    %351 = vmatprep.mubr.f32.mxu0 0.0
    %352 = vmatmul.mubr.f32.gmra.mxu0 %v164
    %v353 = vpop.f32.mrf.mxu0
    %v354 = vadd.f32 0.0, %v353
    %v355 = vpop.f32.mrf.mxu0
    %356 = vmatprep.mubr.f32.mxu0 0.0
    %357 = vmatmul.mubr.f32.gmra.mxu0 %v167
    %v358 = vpop.f32.mrf.mxu0
    %v359 = vadd.f32 0.0, %v358
    %v360 = vpop.f32.mrf.mxu0
    %361 = vmatprep.mubr.f32.mxu0 0.0
    %362 = vmatmul.mubr.f32.gmra.mxu0 %v170
    %v363 = vpop.f32.mrf.mxu0
    %v364 = vadd.f32 0.0, %v363
    %v365 = vpop.f32.mrf.mxu0
    %366 = vmatprep.mubr.f32.mxu0 0.0
    %367 = vmatmul.mubr.f32.gmra.mxu0 %v173
    %v368 = vpop.f32.mrf.mxu0
    %v369 = vadd.f32 0.0, %v368
    %v370 = vpop.f32.mrf.mxu0
    %371 = vmatprep.mubr.f32.mxu0 0.0
    %372 = vmatmul.mubr.f32.gmra.mxu0 %v176
    %v373 = vpop.f32.mrf.mxu0
    %v374 = vadd.f32 0.0, %v373
    %v375 = vpop.f32.mrf.mxu0
    %376 = vmatprep.mubr.f32.mxu0 0.0
    %377 = vmatmul.mubr.f32.gmra.mxu0 %v179
    %v378 = vpop.f32.mrf.mxu0
    %v379 = vadd.f32 0.0, %v378
    %v380 = vpop.f32.mrf.mxu0
    %381 = vmatprep.mubr.f32.mxu0 0.0
    %382 = vmatmul.mubr.f32.gmra.mxu0 %v182
    %v383 = vpop.f32.mrf.mxu0
    %v384 = vadd.f32 0.0, %v383
    %v385 = vpop.f32.mrf.mxu0
    %386 = vmatprep.mubr.f32.mxu0 0.0
    %387 = vmatmul.mubr.f32.gmra.mxu0 %v185
    %v388 = vpop.f32.mrf.mxu0
    %v389 = vadd.f32 0.0, %v388
    %v390 = vpop.f32.mrf.mxu0
    %391 = vmatprep.mubr.f32.mxu0 0.0
    %392 = vmatmul.mubr.f32.gmra.mxu0 %v188
    %v393 = vpop.f32.mrf.mxu0
    %v394 = vadd.f32 0.0, %v393
    %v395 = vpop.f32.mrf.mxu0
    %396 = vmatprep.mubr.f32.mxu0 0.0
    %397 = vmatmul.mubr.f32.gmra.mxu0 %v191
    %v398 = vpop.f32.mrf.mxu0
    %v399 = vadd.f32 0.0, %v398
    %v400 = vpop.f32.mrf.mxu0
    %401 = vmatprep.mubr.f32.mxu0 0.0
    %402 = vmatmul.mubr.f32.gmra.mxu0 %v194
    %v403 = vpop.f32.mrf.mxu0
    %v404 = vadd.f32 0.0, %v403
    %v405 = vpop.f32.mrf.mxu0
    %406 = vmatprep.mubr.f32.mxu0 0.0
    %407 = vmatmul.mubr.f32.gmra.mxu0 %v197
    %v408 = vpop.f32.mrf.mxu0
    %v409 = vadd.f32 0.0, %v408
    %v410 = vpop.f32.mrf.mxu0
    %411 = vmatprep.mubr.f32.mxu0 0.0
    %412 = vmatmul.mubr.f32.gmra.mxu0 %v200
    %v413 = vpop.f32.mrf.mxu0
    %v414 = vadd.f32 0.0, %v413
    %v415 = vpop.f32.mrf.mxu0
    %416 = vmatprep.mubr.f32.mxu0 0.0
    %417 = vmatmul.mubr.f32.gmra.mxu0 %v203
    %v418 = vpop.f32.mrf.mxu0
    %v419 = vadd.f32 0.0, %v418
    %v420 = vpop.f32.mrf.mxu0
    %421 = vmatprep.mubr.f32.mxu0 0.0
    %422 = vmatmul.mubr.f32.gmra.mxu0 %v206
    %v423 = vpop.f32.mrf.mxu0
    %v424 = vadd.f32 0.0, %v423
    %v425 = vpop.f32.mrf.mxu0
    %426 = vmatprep.mubr.f32.mxu0 0.0
    %427 = vmatmul.mubr.f32.gmra.mxu0 %v209
    %v428 = vpop.f32.mrf.mxu0
    %v429 = vadd.f32 0.0, %v428
    %v430 = vpop.f32.mrf.mxu0
    %431 = vmatprep.mubr.f32.mxu0 0.0
    %432 = vmatmul.mubr.f32.gmra.mxu0 %v212
    %v433 = vpop.f32.mrf.mxu0
    %v434 = vadd.f32 0.0, %v433
    %v435 = vpop.f32.mrf.mxu0
    %436 = vmatprep.mubr.f32.mxu0 0.0
    %437 = vmatmul.mubr.f32.gmra.mxu0 %v215
    %v438 = vpop.f32.mrf.mxu0
    %v439 = vadd.f32 0.0, %v438
    %v440 = vpop.f32.mrf.mxu0
    %441 = vmatprep.mubr.f32.mxu0 0.0
    %442 = vmatmul.mubr.f32.gmra.mxu0 %v218
    %v443 = vpop.f32.mrf.mxu0
    %v444 = vadd.f32 0.0, %v443
    %v445 = vpop.f32.mrf.mxu0
    %446 = vmatprep.mubr.f32.mxu0 0.0
    %447 = vmatmul.mubr.f32.gmra.mxu0 %v221
    %v448 = vpop.f32.mrf.mxu0
    %v449 = vadd.f32 0.0, %v448
    %v450 = vpop.f32.mrf.mxu0
    %451 = vdwg.mxu0
    %v452 = vld [vmem:[%s7] sm:$0xff]
    %v453 = vld [vmem:[%s7 + $0x8] sm:$0xff]
    %v454 = vld [vmem:[%s7 + $0x10] sm:$0x1f]
    %v456 = vsel %vm223, %v454, 0
    %458 = vmatprep.subr.mxu0 0.0
    %459 = vmatpush1.msra.mxu0 0.0
    %460 = vmatprep.subr.mxu0 0.0
    %461 = vmatpush1.msra.mxu0 0.0
    %462 = vmatprep.subr.mxu0 0.0
    %463 = vmatpush1.msra.mxu0 0.0
    %464 = vmatprep.subr.mxu0 0.0
    %465 = vmatpush1.msra.mxu0 0.0
    %466 = vmatprep.subr.mxu0 0.0
    %467 = vmatpush1.msra.mxu0 0.0
    %468 = vmatprep.subr.mxu0 0.0
    %469 = vmatpush1.msra.mxu0 0.0
    %470 = vmatprep.subr.mxu0 0.0
    %471 = vmatpush1.msra.mxu0 0.0
    %472 = vmatprep.subr.mxu0 0.0
    %473 = vmatpush1.msra.mxu0 0.0
    %474 = vmatprep.subr.mxu0 0.0
    %475 = vmatpush1.msra.mxu0 0.0
    %476 = vmatprep.subr.mxu0 0.0
    %477 = vmatpush1.msra.mxu0 0.0
    %478 = vmatprep.subr.mxu0 0.0
    %479 = vmatpush1.msra.mxu0 0.0
    %480 = vmatprep.subr.mxu0 0.0
    %481 = vmatpush1.msra.mxu0 0.0
    %482 = vmatprep.subr.mxu0 0.0
    %483 = vmatpush1.msra.mxu0 0.0
    %484 = vmatprep.subr.mxu0 0.0
    %485 = vmatpush1.msra.mxu0 %v456
    %486 = vmatprep.subr.mxu0 0.0
    %487 = vmatpush1.msra.mxu0 %v453
    %488 = vmatprep.subr.mxu0 0.0
    %489 = vmatpush1.msra.mxu0 %v452
    %490 = vmatprep.subr.mxu0 0.0
    %491 = vmatpush2.msra.mxu0 0.0
    %492 = vmatprep.subr.mxu0 0.0
    %493 = vmatpush2.msra.mxu0 0.0
    %494 = vmatprep.subr.mxu0 0.0
    %495 = vmatpush2.msra.mxu0 0.0
    %496 = vmatprep.subr.mxu0 0.0
    %497 = vmatpush2.msra.mxu0 0.0
    %498 = vmatprep.subr.mxu0 0.0
    %499 = vmatpush2.msra.mxu0 0.0
    %500 = vmatprep.subr.mxu0 0.0
    %501 = vmatpush2.msra.mxu0 0.0
    %502 = vmatprep.subr.mxu0 0.0
    %503 = vmatpush2.msra.mxu0 0.0
    %504 = vmatprep.subr.mxu0 0.0
    %505 = vmatpush2.msra.mxu0 0.0
    %506 = vmatprep.subr.mxu0 0.0
    %507 = vmatpush2.msra.mxu0 0.0
    %508 = vmatprep.subr.mxu0 0.0
    %509 = vmatpush2.msra.mxu0 0.0
    %510 = vmatprep.subr.mxu0 0.0
    %511 = vmatpush2.msra.mxu0 0.0
    %512 = vmatprep.subr.mxu0 0.0
    %513 = vmatpush2.msra.mxu0 0.0
    %514 = vmatprep.subr.mxu0 0.0
    %515 = vmatpush2.msra.mxu0 0.0
    %516 = vmatprep.subr.mxu0 0.0
    %517 = vmatpush2.msra.mxu0 0.0
    %518 = vmatprep.subr.mxu0 0.0
    %519 = vmatpush2.msra.mxu0 0.0
    %520 = vmatprep.subr.mxu0 0.0
    %521 = vmatpush2.msra.mxu0 0.0
    %522 = vmatprep.mubr.f32.mxu0 0.0
    %523 = vmatmul.mubr.f32.gmra.mxu0 %v128
    %v524 = vpop.f32.mrf.mxu0
    %v525 = vadd.f32 0.0, %v524
    %v526 = vpop.f32.mrf.mxu0
    %527 = vmatprep.mubr.f32.mxu0 0.0
    %528 = vmatmul.mubr.f32.gmra.mxu0 %v131
    %v529 = vpop.f32.mrf.mxu0
    %v530 = vadd.f32 0.0, %v529
    %v531 = vpop.f32.mrf.mxu0
    %532 = vmatprep.mubr.f32.mxu0 0.0
    %533 = vmatmul.mubr.f32.gmra.mxu0 %v134
    %v534 = vpop.f32.mrf.mxu0
    %v535 = vadd.f32 0.0, %v534
    %v536 = vpop.f32.mrf.mxu0
    %537 = vmatprep.mubr.f32.mxu0 0.0
    %538 = vmatmul.mubr.f32.gmra.mxu0 %v137
    %v539 = vpop.f32.mrf.mxu0
    %v540 = vadd.f32 0.0, %v539
    %v541 = vpop.f32.mrf.mxu0
    %542 = vmatprep.mubr.f32.mxu0 0.0
    %543 = vmatmul.mubr.f32.gmra.mxu0 %v140
    %v544 = vpop.f32.mrf.mxu0
    %v545 = vadd.f32 0.0, %v544
    %v546 = vpop.f32.mrf.mxu0
    %547 = vmatprep.mubr.f32.mxu0 0.0
    %548 = vmatmul.mubr.f32.gmra.mxu0 %v143
    %v549 = vpop.f32.mrf.mxu0
    %v550 = vadd.f32 0.0, %v549
    %v551 = vpop.f32.mrf.mxu0
    %552 = vmatprep.mubr.f32.mxu0 0.0
    %553 = vmatmul.mubr.f32.gmra.mxu0 %v146
    %v554 = vpop.f32.mrf.mxu0
    %v555 = vadd.f32 0.0, %v554
    %v556 = vpop.f32.mrf.mxu0
    %557 = vmatprep.mubr.f32.mxu0 0.0
    %558 = vmatmul.mubr.f32.gmra.mxu0 %v149
    %v559 = vpop.f32.mrf.mxu0
    %v560 = vadd.f32 0.0, %v559
    %v561 = vpop.f32.mrf.mxu0
    %562 = vmatprep.mubr.f32.mxu0 0.0
    %563 = vmatmul.mubr.f32.gmra.mxu0 %v152
    %v564 = vpop.f32.mrf.mxu0
    %v565 = vadd.f32 0.0, %v564
    %v566 = vpop.f32.mrf.mxu0
    %567 = vmatprep.mubr.f32.mxu0 0.0
    %568 = vmatmul.mubr.f32.gmra.mxu0 %v155
    %v569 = vpop.f32.mrf.mxu0
    %v570 = vadd.f32 0.0, %v569
    %v571 = vpop.f32.mrf.mxu0
    %572 = vmatprep.mubr.f32.mxu0 0.0
    %573 = vmatmul.mubr.f32.gmra.mxu0 %v158
    %v574 = vpop.f32.mrf.mxu0
    %v575 = vadd.f32 0.0, %v574
    %v576 = vpop.f32.mrf.mxu0
    %577 = vmatprep.mubr.f32.mxu0 0.0
    %578 = vmatmul.mubr.f32.gmra.mxu0 %v161
    %v579 = vpop.f32.mrf.mxu0
    %v580 = vadd.f32 0.0, %v579
    %v581 = vpop.f32.mrf.mxu0
    %582 = vmatprep.mubr.f32.mxu0 0.0
    %583 = vmatmul.mubr.f32.gmra.mxu0 %v164
    %v584 = vpop.f32.mrf.mxu0
    %v585 = vadd.f32 0.0, %v584
    %v586 = vpop.f32.mrf.mxu0
    %587 = vmatprep.mubr.f32.mxu0 0.0
    %588 = vmatmul.mubr.f32.gmra.mxu0 %v167
    %v589 = vpop.f32.mrf.mxu0
    %v590 = vadd.f32 0.0, %v589
    %v591 = vpop.f32.mrf.mxu0
    %592 = vmatprep.mubr.f32.mxu0 0.0
    %593 = vmatmul.mubr.f32.gmra.mxu0 %v170
    %v594 = vpop.f32.mrf.mxu0
    %v595 = vadd.f32 0.0, %v594
    %v596 = vpop.f32.mrf.mxu0
    %597 = vmatprep.mubr.f32.mxu0 0.0
    %598 = vmatmul.mubr.f32.gmra.mxu0 %v173
    %v599 = vpop.f32.mrf.mxu0
    %v600 = vadd.f32 0.0, %v599
    %v601 = vpop.f32.mrf.mxu0
    %602 = vmatprep.mubr.f32.mxu0 0.0
    %603 = vmatmul.mubr.f32.gmra.mxu0 %v176
    %v604 = vpop.f32.mrf.mxu0
    %v605 = vadd.f32 0.0, %v604
    %v606 = vpop.f32.mrf.mxu0
    %607 = vmatprep.mubr.f32.mxu0 0.0
    %608 = vmatmul.mubr.f32.gmra.mxu0 %v179
    %v609 = vpop.f32.mrf.mxu0
    %v610 = vadd.f32 0.0, %v609
    %v611 = vpop.f32.mrf.mxu0
    %612 = vmatprep.mubr.f32.mxu0 0.0
    %613 = vmatmul.mubr.f32.gmra.mxu0 %v182
    %v614 = vpop.f32.mrf.mxu0
    %v615 = vadd.f32 0.0, %v614
    %v616 = vpop.f32.mrf.mxu0
    %617 = vmatprep.mubr.f32.mxu0 0.0
    %618 = vmatmul.mubr.f32.gmra.mxu0 %v185
    %v619 = vpop.f32.mrf.mxu0
    %v620 = vadd.f32 0.0, %v619
    %v621 = vpop.f32.mrf.mxu0
    %622 = vmatprep.mubr.f32.mxu0 0.0
    %623 = vmatmul.mubr.f32.gmra.mxu0 %v188
    %v624 = vpop.f32.mrf.mxu0
    %v625 = vadd.f32 0.0, %v624
    %v626 = vpop.f32.mrf.mxu0
    %627 = vmatprep.mubr.f32.mxu0 0.0
    %628 = vmatmul.mubr.f32.gmra.mxu0 %v191
    %v629 = vpop.f32.mrf.mxu0
    %v630 = vadd.f32 0.0, %v629
    %v631 = vpop.f32.mrf.mxu0
    %632 = vmatprep.mubr.f32.mxu0 0.0
    %633 = vmatmul.mubr.f32.gmra.mxu0 %v194
    %v634 = vpop.f32.mrf.mxu0
    %v635 = vadd.f32 0.0, %v634
    %v636 = vpop.f32.mrf.mxu0
    %637 = vmatprep.mubr.f32.mxu0 0.0
    %638 = vmatmul.mubr.f32.gmra.mxu0 %v197
    %v639 = vpop.f32.mrf.mxu0
    %v640 = vadd.f32 0.0, %v639
    %v641 = vpop.f32.mrf.mxu0
    %642 = vmatprep.mubr.f32.mxu0 0.0
    %643 = vmatmul.mubr.f32.gmra.mxu0 %v200
    %v644 = vpop.f32.mrf.mxu0
    %v645 = vadd.f32 0.0, %v644
    %v646 = vpop.f32.mrf.mxu0
    %647 = vmatprep.mubr.f32.mxu0 0.0
    %648 = vmatmul.mubr.f32.gmra.mxu0 %v203
    %v649 = vpop.f32.mrf.mxu0
    %v650 = vadd.f32 0.0, %v649
    %v651 = vpop.f32.mrf.mxu0
    %652 = vmatprep.mubr.f32.mxu0 0.0
    %653 = vmatmul.mubr.f32.gmra.mxu0 %v206
    %v654 = vpop.f32.mrf.mxu0
    %v655 = vadd.f32 0.0, %v654
    %v656 = vpop.f32.mrf.mxu0
    %657 = vmatprep.mubr.f32.mxu0 0.0
    %658 = vmatmul.mubr.f32.gmra.mxu0 %v209
    %v659 = vpop.f32.mrf.mxu0
    %v660 = vadd.f32 0.0, %v659
    %v661 = vpop.f32.mrf.mxu0
    %662 = vmatprep.mubr.f32.mxu0 0.0
    %663 = vmatmul.mubr.f32.gmra.mxu0 %v212
    %v664 = vpop.f32.mrf.mxu0
    %v665 = vadd.f32 0.0, %v664
    %v666 = vpop.f32.mrf.mxu0
    %667 = vmatprep.mubr.f32.mxu0 0.0
    %668 = vmatmul.mubr.f32.gmra.mxu0 %v215
    %v669 = vpop.f32.mrf.mxu0
    %v670 = vadd.f32 0.0, %v669
    %v671 = vpop.f32.mrf.mxu0
    %672 = vmatprep.mubr.f32.mxu0 0.0
    %673 = vmatmul.mubr.f32.gmra.mxu0 %v218
    %v674 = vpop.f32.mrf.mxu0
    %v675 = vadd.f32 0.0, %v674
    %v676 = vpop.f32.mrf.mxu0
    %677 = vmatprep.mubr.f32.mxu0 0.0
    %678 = vmatmul.mubr.f32.gmra.mxu0 %v221
    %v679 = vpop.f32.mrf.mxu0
    %v680 = vadd.f32 0.0, %v679
    %v681 = vpop.f32.mrf.mxu0
    %682 = vdwg.mxu0
    %v683 = vld [vmem:[%s2] sm:$0xff]
    %v684 = vld [vmem:[%s2 + $0x8] sm:$0xff]
    %v685 = vmul.f32 %v294, %v683
    %v686 = vmul.f32 %v299, %v684
    %v687 = vmul.f32 %v304, %v683
    %v688 = vmul.f32 %v309, %v684
    %v689 = vmul.f32 %v314, %v683
    %v690 = vmul.f32 %v319, %v684
    %v691 = vmul.f32 %v324, %v683
    %v692 = vmul.f32 %v329, %v684
    %v693 = vmul.f32 %v334, %v683
    %v694 = vmul.f32 %v339, %v684
    %v695 = vmul.f32 %v344, %v683
    %v696 = vmul.f32 %v349, %v684
    %v697 = vmul.f32 %v354, %v683
    %v698 = vmul.f32 %v359, %v684
    %v699 = vmul.f32 %v364, %v683
    %v700 = vmul.f32 %v369, %v684
    %v701 = vmul.f32 %v374, %v683
    %v702 = vmul.f32 %v379, %v684
    %v703 = vmul.f32 %v384, %v683
    %v704 = vmul.f32 %v389, %v684
    %v705 = vmul.f32 %v394, %v683
    %v706 = vmul.f32 %v399, %v684
    %v707 = vmul.f32 %v404, %v683
    %v708 = vmul.f32 %v409, %v684
    %v709 = vmul.f32 %v414, %v683
    %v710 = vmul.f32 %v419, %v684
    %v711 = vmul.f32 %v424, %v683
    %v712 = vmul.f32 %v429, %v684
    %v713 = vmul.f32 %v434, %v683
    %v714 = vmul.f32 %v439, %v684
    %v715 = vmul.f32 %v444, %v683
    %v716 = vmul.f32 %v449, %v684
    %v717 = vadd.f32 %v685, %v686
    %v718 = vrot.slane %v717, 4
    %v719 = vadd.f32 %v717, %v718
    %v720 = vrot.slane %v719, 2
    %v721 = vadd.f32 %v719, %v720
    %v722 = vrot.slane %v721, 1
    %v723 = vadd.f32 %v721, %v722
    %v724 = vadd.f32 %v687, %v688
    %v725 = vrot.slane %v724, 4
    %v726 = vadd.f32 %v724, %v725
    %v727 = vrot.slane %v726, 2
    %v728 = vadd.f32 %v726, %v727
    %v729 = vrot.slane %v728, 1
    %v730 = vadd.f32 %v728, %v729
    %v731 = vadd.f32 %v689, %v690
    %v732 = vrot.slane %v731, 4
    %v733 = vadd.f32 %v731, %v732
    %v734 = vrot.slane %v733, 2
    %v735 = vadd.f32 %v733, %v734
    %v736 = vrot.slane %v735, 1
    %v737 = vadd.f32 %v735, %v736
    %v738 = vadd.f32 %v691, %v692
    %v739 = vrot.slane %v738, 4
    %v740 = vadd.f32 %v738, %v739
    %v741 = vrot.slane %v740, 2
    %v742 = vadd.f32 %v740, %v741
    %v743 = vrot.slane %v742, 1
    %v744 = vadd.f32 %v742, %v743
    %v745 = vadd.f32 %v693, %v694
    %v746 = vrot.slane %v745, 4
    %v747 = vadd.f32 %v745, %v746
    %v748 = vrot.slane %v747, 2
    %v749 = vadd.f32 %v747, %v748
    %v750 = vrot.slane %v749, 1
    %v751 = vadd.f32 %v749, %v750
    %v752 = vadd.f32 %v695, %v696
    %v753 = vrot.slane %v752, 4
    %v754 = vadd.f32 %v752, %v753
    %v755 = vrot.slane %v754, 2
    %v756 = vadd.f32 %v754, %v755
    %v757 = vrot.slane %v756, 1
    %v758 = vadd.f32 %v756, %v757
    %v759 = vadd.f32 %v697, %v698
    %v760 = vrot.slane %v759, 4
    %v761 = vadd.f32 %v759, %v760
    %v762 = vrot.slane %v761, 2
    %v763 = vadd.f32 %v761, %v762
    %v764 = vrot.slane %v763, 1
    %v765 = vadd.f32 %v763, %v764
    %v766 = vadd.f32 %v699, %v700
    %v767 = vrot.slane %v766, 4
    %v768 = vadd.f32 %v766, %v767
    %v769 = vrot.slane %v768, 2
    %v770 = vadd.f32 %v768, %v769
    %v771 = vrot.slane %v770, 1
    %v772 = vadd.f32 %v770, %v771
    %v773 = vadd.f32 %v701, %v702
    %v774 = vrot.slane %v773, 4
    %v775 = vadd.f32 %v773, %v774
    %v776 = vrot.slane %v775, 2
    %v777 = vadd.f32 %v775, %v776
    %v778 = vrot.slane %v777, 1
    %v779 = vadd.f32 %v777, %v778
    %v780 = vadd.f32 %v703, %v704
    %v781 = vrot.slane %v780, 4
    %v782 = vadd.f32 %v780, %v781
    %v783 = vrot.slane %v782, 2
    %v784 = vadd.f32 %v782, %v783
    %v785 = vrot.slane %v784, 1
    %v786 = vadd.f32 %v784, %v785
    %v787 = vadd.f32 %v705, %v706
    %v788 = vrot.slane %v787, 4
    %v789 = vadd.f32 %v787, %v788
    %v790 = vrot.slane %v789, 2
    %v791 = vadd.f32 %v789, %v790
    %v792 = vrot.slane %v791, 1
    %v793 = vadd.f32 %v791, %v792
    %v794 = vadd.f32 %v707, %v708
    %v795 = vrot.slane %v794, 4
    %v796 = vadd.f32 %v794, %v795
    %v797 = vrot.slane %v796, 2
    %v798 = vadd.f32 %v796, %v797
    %v799 = vrot.slane %v798, 1
    %v800 = vadd.f32 %v798, %v799
    %v801 = vadd.f32 %v709, %v710
    %v802 = vrot.slane %v801, 4
    %v803 = vadd.f32 %v801, %v802
    %v804 = vrot.slane %v803, 2
    %v805 = vadd.f32 %v803, %v804
    %v806 = vrot.slane %v805, 1
    %v807 = vadd.f32 %v805, %v806
    %v808 = vadd.f32 %v711, %v712
    %v809 = vrot.slane %v808, 4
    %v810 = vadd.f32 %v808, %v809
    %v811 = vrot.slane %v810, 2
    %v812 = vadd.f32 %v810, %v811
    %v813 = vrot.slane %v812, 1
    %v814 = vadd.f32 %v812, %v813
    %v815 = vadd.f32 %v713, %v714
    %v816 = vrot.slane %v815, 4
    %v817 = vadd.f32 %v815, %v816
    %v818 = vrot.slane %v817, 2
    %v819 = vadd.f32 %v817, %v818
    %v820 = vrot.slane %v819, 1
    %v821 = vadd.f32 %v819, %v820
    %v822 = vadd.f32 %v715, %v716
    %v823 = vrot.slane %v822, 4
    %v824 = vadd.f32 %v822, %v823
    %v825 = vrot.slane %v824, 2
    %v826 = vadd.f32 %v824, %v825
    %v827 = vrot.slane %v826, 1
    %v828 = vadd.f32 %v826, %v827
    %v829 = vld [vmem:[#allocation2] sm:$0xff]
    %v830 = vld [vmem:[#allocation2 + $0x8] sm:$0xff]
    %v831 = vmul.f32 %v829, %v525
    %v832 = vmul.f32 %v830, %v530
    %v833 = vmul.f32 %v829, %v535
    %v834 = vmul.f32 %v830, %v540
    %v835 = vmul.f32 %v829, %v545
    %v836 = vmul.f32 %v830, %v550
    %v837 = vmul.f32 %v829, %v555
    %v838 = vmul.f32 %v830, %v560
    %v839 = vmul.f32 %v829, %v565
    %v840 = vmul.f32 %v830, %v570
    %v841 = vmul.f32 %v829, %v575
    %v842 = vmul.f32 %v830, %v580
    %v843 = vmul.f32 %v829, %v585
    %v844 = vmul.f32 %v830, %v590
    %v845 = vmul.f32 %v829, %v595
    %v846 = vmul.f32 %v830, %v600
    %v847 = vmul.f32 %v829, %v605
    %v848 = vmul.f32 %v830, %v610
    %v849 = vmul.f32 %v829, %v615
    %v850 = vmul.f32 %v830, %v620
    %v851 = vmul.f32 %v829, %v625
    %v852 = vmul.f32 %v830, %v630
    %v853 = vmul.f32 %v829, %v635
    %v854 = vmul.f32 %v830, %v640
    %v855 = vmul.f32 %v829, %v645
    %v856 = vmul.f32 %v830, %v650
    %v857 = vmul.f32 %v829, %v655
    %v858 = vmul.f32 %v830, %v660
    %v859 = vmul.f32 %v829, %v665
    %v860 = vmul.f32 %v830, %v670
    %v861 = vmul.f32 %v829, %v675
    %v862 = vmul.f32 %v830, %v680
    %v863 = vld [vmem:[%s0] sm:$0xff]
    %v864 = vld [vmem:[%s0 + $0x8] sm:$0xff]
    %vm881 = vcmask 1041409
    %v882 = vsel %vm881, %v730, %v723
    %vm883 = vcmask 1042434
    %v884 = vsel %vm883, %v737, %v882
    %vm885 = vcmask 1043459
    %v886 = vsel %vm885, %v744, %v884
    %vm887 = vcmask 1044484
    %v888 = vsel %vm887, %v751, %v886
    %vm889 = vcmask 1045509
    %v890 = vsel %vm889, %v758, %v888
    %vm891 = vcmask 1046534
    %v892 = vsel %vm891, %v765, %v890
    %vm893 = vcmask 1047559
    %v894 = vsel %vm893, %v772, %v892
    %v895 = vsel %vm881, %v786, %v779
    %v896 = vsel %vm883, %v793, %v895
    %v897 = vsel %vm885, %v800, %v896
    %v898 = vsel %vm887, %v807, %v897
    %v899 = vsel %vm889, %v814, %v898
    %v900 = vsel %vm891, %v821, %v899
    %v901 = vsel %vm893, %v828, %v900
    %902 = vrot.lane.b32.xlu0 %v894, 32
    %v903 = vpop.permute.xlu0 %902
    %904 = vrot.lane.b32.xlu0 %v901, 32
    %v905 = vpop.permute.xlu0 %904
    %v908 = vadd.f32 %v863, %v903
    %v909 = vadd.f32 %v864, %v905
    %v910 = vld [vmem:[%s5] sm:$0xf]
    %v911 = vld [vmem:[%s5 + $0x4] sm:$0xf]
    %v912 = vunpack.c.l.bf16 %v910
    %v913 = vunpack.c.l.bf16 %v911
    %v914 = vlaneseq
    %v915 = vshrl.u32 %v914, 7
    %v916 = vsub.s32 0, %v915
    %v917 = vrot.slane %v912, %v916
    %919 = vbcast.lane.b32.xlu0 %v917, 256
    %v920 = vpop.permute.xlu0 %919
    %s922 = sor.u32 256, 8
    %923 = vbcast.lane.b32.xlu0 %v917, %s922
    %v924 = vpop.permute.xlu0 %923
    %v925 = vlaneseq
    %v926 = vshrl.u32 %v925, 7
    %v927 = vsub.s32 1, %v926
    %v928 = vrot.slane %v912, %v927
    %930 = vbcast.lane.b32.xlu0 %v928, 256
    %v931 = vpop.permute.xlu0 %930
    %s933 = sor.u32 256, 8
    %934 = vbcast.lane.b32.xlu0 %v928, %s933
    %v935 = vpop.permute.xlu0 %934
    %v936 = vlaneseq
    %v937 = vshrl.u32 %v936, 7
    %v938 = vsub.s32 2, %v937
    %v939 = vrot.slane %v912, %v938
    %941 = vbcast.lane.b32.xlu0 %v939, 256
    %v942 = vpop.permute.xlu0 %941
    %s944 = sor.u32 256, 8
    %945 = vbcast.lane.b32.xlu0 %v939, %s944
    %v946 = vpop.permute.xlu0 %945
    %v947 = vlaneseq
    %v948 = vshrl.u32 %v947, 7
    %v949 = vsub.s32 3, %v948
    %v950 = vrot.slane %v912, %v949
    %952 = vbcast.lane.b32.xlu0 %v950, 256
    %v953 = vpop.permute.xlu0 %952
    %s955 = sor.u32 256, 8
    %956 = vbcast.lane.b32.xlu0 %v950, %s955
    %v957 = vpop.permute.xlu0 %956
    %v958 = vlaneseq
    %v959 = vshrl.u32 %v958, 7
    %v960 = vsub.s32 4, %v959
    %v961 = vrot.slane %v912, %v960
    %963 = vbcast.lane.b32.xlu0 %v961, 256
    %v964 = vpop.permute.xlu0 %963
    %s966 = sor.u32 256, 8
    %967 = vbcast.lane.b32.xlu0 %v961, %s966
    %v968 = vpop.permute.xlu0 %967
    %v969 = vlaneseq
    %v970 = vshrl.u32 %v969, 7
    %v971 = vsub.s32 5, %v970
    %v972 = vrot.slane %v912, %v971
    %974 = vbcast.lane.b32.xlu0 %v972, 256
    %v975 = vpop.permute.xlu0 %974
    %s977 = sor.u32 256, 8
    %978 = vbcast.lane.b32.xlu0 %v972, %s977
    %v979 = vpop.permute.xlu0 %978
    %v980 = vlaneseq
    %v981 = vshrl.u32 %v980, 7
    %v982 = vsub.s32 6, %v981
    %v983 = vrot.slane %v912, %v982
    %985 = vbcast.lane.b32.xlu0 %v983, 256
    %v986 = vpop.permute.xlu0 %985
    %s988 = sor.u32 256, 8
    %989 = vbcast.lane.b32.xlu0 %v983, %s988
    %v990 = vpop.permute.xlu0 %989
    %v991 = vlaneseq
    %v992 = vshrl.u32 %v991, 7
    %v993 = vsub.s32 7, %v992
    %v994 = vrot.slane %v912, %v993
    %996 = vbcast.lane.b32.xlu0 %v994, 256
    %v997 = vpop.permute.xlu0 %996
    %s999 = sor.u32 256, 8
    %1000 = vbcast.lane.b32.xlu0 %v994, %s999
    %v1001 = vpop.permute.xlu0 %1000
    %v1002 = vlaneseq
    %v1003 = vshrl.u32 %v1002, 7
    %v1004 = vsub.s32 0, %v1003
    %v1005 = vrot.slane %v913, %v1004
    %1007 = vbcast.lane.b32.xlu0 %v1005, 256
    %v1008 = vpop.permute.xlu0 %1007
    %s1010 = sor.u32 256, 8
    %1011 = vbcast.lane.b32.xlu0 %v1005, %s1010
    %v1012 = vpop.permute.xlu0 %1011
    %v1013 = vlaneseq
    %v1014 = vshrl.u32 %v1013, 7
    %v1015 = vsub.s32 1, %v1014
    %v1016 = vrot.slane %v913, %v1015
    %1018 = vbcast.lane.b32.xlu0 %v1016, 256
    %v1019 = vpop.permute.xlu0 %1018
    %s1021 = sor.u32 256, 8
    %1022 = vbcast.lane.b32.xlu0 %v1016, %s1021
    %v1023 = vpop.permute.xlu0 %1022
    %v1024 = vlaneseq
    %v1025 = vshrl.u32 %v1024, 7
    %v1026 = vsub.s32 2, %v1025
    %v1027 = vrot.slane %v913, %v1026
    %1029 = vbcast.lane.b32.xlu0 %v1027, 256
    %v1030 = vpop.permute.xlu0 %1029
    %s1032 = sor.u32 256, 8
    %1033 = vbcast.lane.b32.xlu0 %v1027, %s1032
    %v1034 = vpop.permute.xlu0 %1033
    %v1035 = vlaneseq
    %v1036 = vshrl.u32 %v1035, 7
    %v1037 = vsub.s32 3, %v1036
    %v1038 = vrot.slane %v913, %v1037
    %1040 = vbcast.lane.b32.xlu0 %v1038, 256
    %v1041 = vpop.permute.xlu0 %1040
    %s1043 = sor.u32 256, 8
    %1044 = vbcast.lane.b32.xlu0 %v1038, %s1043
    %v1045 = vpop.permute.xlu0 %1044
    %v1046 = vlaneseq
    %v1047 = vshrl.u32 %v1046, 7
    %v1048 = vsub.s32 4, %v1047
    %v1049 = vrot.slane %v913, %v1048
    %1051 = vbcast.lane.b32.xlu0 %v1049, 256
    %v1052 = vpop.permute.xlu0 %1051
    %s1054 = sor.u32 256, 8
    %1055 = vbcast.lane.b32.xlu0 %v1049, %s1054
    %v1056 = vpop.permute.xlu0 %1055
    %v1057 = vlaneseq
    %v1058 = vshrl.u32 %v1057, 7
    %v1059 = vsub.s32 5, %v1058
    %v1060 = vrot.slane %v913, %v1059
    %1062 = vbcast.lane.b32.xlu0 %v1060, 256
    %v1063 = vpop.permute.xlu0 %1062
    %s1065 = sor.u32 256, 8
    %1066 = vbcast.lane.b32.xlu0 %v1060, %s1065
    %v1067 = vpop.permute.xlu0 %1066
    %v1068 = vlaneseq
    %v1069 = vshrl.u32 %v1068, 7
    %v1070 = vsub.s32 6, %v1069
    %v1071 = vrot.slane %v913, %v1070
    %1073 = vbcast.lane.b32.xlu0 %v1071, 256
    %v1074 = vpop.permute.xlu0 %1073
    %s1076 = sor.u32 256, 8
    %1077 = vbcast.lane.b32.xlu0 %v1071, %s1076
    %v1078 = vpop.permute.xlu0 %1077
    %v1079 = vlaneseq
    %v1080 = vshrl.u32 %v1079, 7
    %v1081 = vsub.s32 7, %v1080
    %v1082 = vrot.slane %v913, %v1081
    %1084 = vbcast.lane.b32.xlu0 %v1082, 256
    %v1085 = vpop.permute.xlu0 %1084
    %s1087 = sor.u32 256, 8
    %1088 = vbcast.lane.b32.xlu0 %v1082, %s1087
    %v1089 = vpop.permute.xlu0 %1088
    %v1090 = vmul.f32 %v920, %v831
    %v1091 = vmul.f32 %v924, %v832
    %v1092 = vmul.f32 %v931, %v833
    %v1093 = vmul.f32 %v935, %v834
    %v1094 = vmul.f32 %v942, %v835
    %v1095 = vmul.f32 %v946, %v836
    %v1096 = vmul.f32 %v953, %v837
    %v1097 = vmul.f32 %v957, %v838
    %v1098 = vmul.f32 %v964, %v839
    %v1099 = vmul.f32 %v968, %v840
    %v1100 = vmul.f32 %v975, %v841
    %v1101 = vmul.f32 %v979, %v842
    %v1102 = vmul.f32 %v986, %v843
    %v1103 = vmul.f32 %v990, %v844
    %v1104 = vmul.f32 %v997, %v845
    %v1105 = vmul.f32 %v1001, %v846
    %v1106 = vmul.f32 %v1008, %v847
    %v1107 = vmul.f32 %v1012, %v848
    %v1108 = vmul.f32 %v1019, %v849
    %v1109 = vmul.f32 %v1023, %v850
    %v1110 = vmul.f32 %v1030, %v851
    %v1111 = vmul.f32 %v1034, %v852
    %v1112 = vmul.f32 %v1041, %v853
    %v1113 = vmul.f32 %v1045, %v854
    %v1114 = vmul.f32 %v1052, %v855
    %v1115 = vmul.f32 %v1056, %v856
    %v1116 = vmul.f32 %v1063, %v857
    %v1117 = vmul.f32 %v1067, %v858
    %v1118 = vmul.f32 %v1074, %v859
    %v1119 = vmul.f32 %v1078, %v860
    %v1120 = vmul.f32 %v1085, %v861
    %v1121 = vmul.f32 %v1089, %v862
    %vm1122 = vcmask 261120
    %v1123 = vsel %vm1122, %v1090, 0.0
    %v1124 = vsel %vm1122, %v1091, 0.0
    %v1125 = vadd.f32 %v1123, %v1124
    %v1126 = vrot.slane %v1125, 4
    %v1127 = vadd.f32 %v1125, %v1126
    %v1128 = vrot.slane %v1127, 2
    %v1129 = vadd.f32 %v1127, %v1128
    %v1130 = vrot.slane %v1129, 1
    %v1131 = vadd.f32 %v1129, %v1130
    %v1132 = vsel %vm1122, %v1092, 0.0
    %v1133 = vsel %vm1122, %v1093, 0.0
    %v1134 = vadd.f32 %v1132, %v1133
    %v1135 = vrot.slane %v1134, 4
    %v1136 = vadd.f32 %v1134, %v1135
    %v1137 = vrot.slane %v1136, 2
    %v1138 = vadd.f32 %v1136, %v1137
    %v1139 = vrot.slane %v1138, 1
    %v1140 = vadd.f32 %v1138, %v1139
    %v1141 = vsel %vm1122, %v1094, 0.0
    %v1142 = vsel %vm1122, %v1095, 0.0
    %v1143 = vadd.f32 %v1141, %v1142
    %v1144 = vrot.slane %v1143, 4
    %v1145 = vadd.f32 %v1143, %v1144
    %v1146 = vrot.slane %v1145, 2
    %v1147 = vadd.f32 %v1145, %v1146
    %v1148 = vrot.slane %v1147, 1
    %v1149 = vadd.f32 %v1147, %v1148
    %v1150 = vsel %vm1122, %v1096, 0.0
    %v1151 = vsel %vm1122, %v1097, 0.0
    %v1152 = vadd.f32 %v1150, %v1151
    %v1153 = vrot.slane %v1152, 4
    %v1154 = vadd.f32 %v1152, %v1153
    %v1155 = vrot.slane %v1154, 2
    %v1156 = vadd.f32 %v1154, %v1155
    %v1157 = vrot.slane %v1156, 1
    %v1158 = vadd.f32 %v1156, %v1157
    %v1159 = vsel %vm1122, %v1098, 0.0
    %v1160 = vsel %vm1122, %v1099, 0.0
    %v1161 = vadd.f32 %v1159, %v1160
    %v1162 = vrot.slane %v1161, 4
    %v1163 = vadd.f32 %v1161, %v1162
    %v1164 = vrot.slane %v1163, 2
    %v1165 = vadd.f32 %v1163, %v1164
    %v1166 = vrot.slane %v1165, 1
    %v1167 = vadd.f32 %v1165, %v1166
    %v1168 = vsel %vm1122, %v1100, 0.0
    %v1169 = vsel %vm1122, %v1101, 0.0
    %v1170 = vadd.f32 %v1168, %v1169
    %v1171 = vrot.slane %v1170, 4
    %v1172 = vadd.f32 %v1170, %v1171
    %v1173 = vrot.slane %v1172, 2
    %v1174 = vadd.f32 %v1172, %v1173
    %v1175 = vrot.slane %v1174, 1
    %v1176 = vadd.f32 %v1174, %v1175
    %v1177 = vsel %vm1122, %v1102, 0.0
    %v1178 = vsel %vm1122, %v1103, 0.0
    %v1179 = vadd.f32 %v1177, %v1178
    %v1180 = vrot.slane %v1179, 4
    %v1181 = vadd.f32 %v1179, %v1180
    %v1182 = vrot.slane %v1181, 2
    %v1183 = vadd.f32 %v1181, %v1182
    %v1184 = vrot.slane %v1183, 1
    %v1185 = vadd.f32 %v1183, %v1184
    %v1186 = vsel %vm1122, %v1104, 0.0
    %v1187 = vsel %vm1122, %v1105, 0.0
    %v1188 = vadd.f32 %v1186, %v1187
    %v1189 = vrot.slane %v1188, 4
    %v1190 = vadd.f32 %v1188, %v1189
    %v1191 = vrot.slane %v1190, 2
    %v1192 = vadd.f32 %v1190, %v1191
    %v1193 = vrot.slane %v1192, 1
    %v1194 = vadd.f32 %v1192, %v1193
    %v1195 = vsel %vm1122, %v1106, 0.0
    %v1196 = vsel %vm1122, %v1107, 0.0
    %v1197 = vadd.f32 %v1195, %v1196
    %v1198 = vrot.slane %v1197, 4
    %v1199 = vadd.f32 %v1197, %v1198
    %v1200 = vrot.slane %v1199, 2
    %v1201 = vadd.f32 %v1199, %v1200
    %v1202 = vrot.slane %v1201, 1
    %v1203 = vadd.f32 %v1201, %v1202
    %v1204 = vsel %vm1122, %v1108, 0.0
    %v1205 = vsel %vm1122, %v1109, 0.0
    %v1206 = vadd.f32 %v1204, %v1205
    %v1207 = vrot.slane %v1206, 4
    %v1208 = vadd.f32 %v1206, %v1207
    %v1209 = vrot.slane %v1208, 2
    %v1210 = vadd.f32 %v1208, %v1209
    %v1211 = vrot.slane %v1210, 1
    %v1212 = vadd.f32 %v1210, %v1211
    %v1213 = vsel %vm1122, %v1110, 0.0
    %v1214 = vsel %vm1122, %v1111, 0.0
    %v1215 = vadd.f32 %v1213, %v1214
    %v1216 = vrot.slane %v1215, 4
    %v1217 = vadd.f32 %v1215, %v1216
    %v1218 = vrot.slane %v1217, 2
    %v1219 = vadd.f32 %v1217, %v1218
    %v1220 = vrot.slane %v1219, 1
    %v1221 = vadd.f32 %v1219, %v1220
    %v1222 = vsel %vm1122, %v1112, 0.0
    %v1223 = vsel %vm1122, %v1113, 0.0
    %v1224 = vadd.f32 %v1222, %v1223
    %v1225 = vrot.slane %v1224, 4
    %v1226 = vadd.f32 %v1224, %v1225
    %v1227 = vrot.slane %v1226, 2
    %v1228 = vadd.f32 %v1226, %v1227
    %v1229 = vrot.slane %v1228, 1
    %v1230 = vadd.f32 %v1228, %v1229
    %v1231 = vsel %vm1122, %v1114, 0.0
    %v1232 = vsel %vm1122, %v1115, 0.0
    %v1233 = vadd.f32 %v1231, %v1232
    %v1234 = vrot.slane %v1233, 4
    %v1235 = vadd.f32 %v1233, %v1234
    %v1236 = vrot.slane %v1235, 2
    %v1237 = vadd.f32 %v1235, %v1236
    %v1238 = vrot.slane %v1237, 1
    %v1239 = vadd.f32 %v1237, %v1238
    %v1240 = vsel %vm1122, %v1116, 0.0
    %v1241 = vsel %vm1122, %v1117, 0.0
    %v1242 = vadd.f32 %v1240, %v1241
    %v1243 = vrot.slane %v1242, 4
    %v1244 = vadd.f32 %v1242, %v1243
    %v1245 = vrot.slane %v1244, 2
    %v1246 = vadd.f32 %v1244, %v1245
    %v1247 = vrot.slane %v1246, 1
    %v1248 = vadd.f32 %v1246, %v1247
    %v1249 = vsel %vm1122, %v1118, 0.0
    %v1250 = vsel %vm1122, %v1119, 0.0
    %v1251 = vadd.f32 %v1249, %v1250
    %v1252 = vrot.slane %v1251, 4
    %v1253 = vadd.f32 %v1251, %v1252
    %v1254 = vrot.slane %v1253, 2
    %v1255 = vadd.f32 %v1253, %v1254
    %v1256 = vrot.slane %v1255, 1
    %v1257 = vadd.f32 %v1255, %v1256
    %v1258 = vsel %vm1122, %v1120, 0.0
    %v1259 = vsel %vm1122, %v1121, 0.0
    %v1260 = vadd.f32 %v1258, %v1259
    %v1261 = vrot.slane %v1260, 4
    %v1262 = vadd.f32 %v1260, %v1261
    %v1263 = vrot.slane %v1262, 2
    %v1264 = vadd.f32 %v1262, %v1263
    %v1265 = vrot.slane %v1264, 1
    %v1266 = vadd.f32 %v1264, %v1265
    %v1267 = vld [vmem:[%s1] sm:$0xff]
    %v1268 = vld [vmem:[%s1 + $0x8] sm:$0xff]
    %v1271 = vadd.f32 %v1267, %v894
    %v1272 = vadd.f32 %v1268, %v901
    %v1289 = vsel %vm881, %v1140, %v1131
    %v1290 = vsel %vm883, %v1149, %v1289
    %v1291 = vsel %vm885, %v1158, %v1290
    %v1292 = vsel %vm887, %v1167, %v1291
    %v1293 = vsel %vm889, %v1176, %v1292
    %v1294 = vsel %vm891, %v1185, %v1293
    %v1295 = vsel %vm893, %v1194, %v1294
    %v1296 = vsel %vm881, %v1212, %v1203
    %v1297 = vsel %vm883, %v1221, %v1296
    %v1298 = vsel %vm885, %v1230, %v1297
    %v1299 = vsel %vm887, %v1239, %v1298
    %v1300 = vsel %vm889, %v1248, %v1299
    %v1301 = vsel %vm891, %v1257, %v1300
    %v1302 = vsel %vm893, %v1266, %v1301
    %v1305 = vadd.f32 %v1271, %v1295
    %v1306 = vadd.f32 %v1272, %v1302
    %s1307 = scalar_lea.vmem %s5, 8
    %v1308 = vld [vmem:[%s1307] sm:$0xf]
    %v1309 = vld [vmem:[%s1307 + $0x4] sm:$0xf]
    %v1310 = vunpack.c.l.bf16 %v1308
    %v1311 = vunpack.c.l.bf16 %v1309
    %v1312 = vlaneseq
    %v1313 = vshrl.u32 %v1312, 7
    %v1314 = vsub.s32 0, %v1313
    %v1315 = vrot.slane %v1310, %v1314
    %1317 = vbcast.lane.b32.xlu0 %v1315, 256
    %v1318 = vpop.permute.xlu0 %1317
    %s1320 = sor.u32 256, 8
    %1321 = vbcast.lane.b32.xlu0 %v1315, %s1320
    %v1322 = vpop.permute.xlu0 %1321
    %v1323 = vlaneseq
    %v1324 = vshrl.u32 %v1323, 7
    %v1325 = vsub.s32 1, %v1324
    %v1326 = vrot.slane %v1310, %v1325
    %1328 = vbcast.lane.b32.xlu0 %v1326, 256
    %v1329 = vpop.permute.xlu0 %1328
    %s1331 = sor.u32 256, 8
    %1332 = vbcast.lane.b32.xlu0 %v1326, %s1331
    %v1333 = vpop.permute.xlu0 %1332
    %v1334 = vlaneseq
    %v1335 = vshrl.u32 %v1334, 7
    %v1336 = vsub.s32 2, %v1335
    %v1337 = vrot.slane %v1310, %v1336
    %1339 = vbcast.lane.b32.xlu0 %v1337, 256
    %v1340 = vpop.permute.xlu0 %1339
    %s1342 = sor.u32 256, 8
    %1343 = vbcast.lane.b32.xlu0 %v1337, %s1342
    %v1344 = vpop.permute.xlu0 %1343
    %v1345 = vlaneseq
    %v1346 = vshrl.u32 %v1345, 7
    %v1347 = vsub.s32 3, %v1346
    %v1348 = vrot.slane %v1310, %v1347
    %1350 = vbcast.lane.b32.xlu0 %v1348, 256
    %v1351 = vpop.permute.xlu0 %1350
    %s1353 = sor.u32 256, 8
    %1354 = vbcast.lane.b32.xlu0 %v1348, %s1353
    %v1355 = vpop.permute.xlu0 %1354
    %v1356 = vlaneseq
    %v1357 = vshrl.u32 %v1356, 7
    %v1358 = vsub.s32 4, %v1357
    %v1359 = vrot.slane %v1310, %v1358
    %1361 = vbcast.lane.b32.xlu0 %v1359, 256
    %v1362 = vpop.permute.xlu0 %1361
    %s1364 = sor.u32 256, 8
    %1365 = vbcast.lane.b32.xlu0 %v1359, %s1364
    %v1366 = vpop.permute.xlu0 %1365
    %v1367 = vlaneseq
    %v1368 = vshrl.u32 %v1367, 7
    %v1369 = vsub.s32 5, %v1368
    %v1370 = vrot.slane %v1310, %v1369
    %1372 = vbcast.lane.b32.xlu0 %v1370, 256
    %v1373 = vpop.permute.xlu0 %1372
    %s1375 = sor.u32 256, 8
    %1376 = vbcast.lane.b32.xlu0 %v1370, %s1375
    %v1377 = vpop.permute.xlu0 %1376
    %v1378 = vlaneseq
    %v1379 = vshrl.u32 %v1378, 7
    %v1380 = vsub.s32 6, %v1379
    %v1381 = vrot.slane %v1310, %v1380
    %1383 = vbcast.lane.b32.xlu0 %v1381, 256
    %v1384 = vpop.permute.xlu0 %1383
    %s1386 = sor.u32 256, 8
    %1387 = vbcast.lane.b32.xlu0 %v1381, %s1386
    %v1388 = vpop.permute.xlu0 %1387
    %v1389 = vlaneseq
    %v1390 = vshrl.u32 %v1389, 7
    %v1391 = vsub.s32 7, %v1390
    %v1392 = vrot.slane %v1310, %v1391
    %1394 = vbcast.lane.b32.xlu0 %v1392, 256
    %v1395 = vpop.permute.xlu0 %1394
    %s1397 = sor.u32 256, 8
    %1398 = vbcast.lane.b32.xlu0 %v1392, %s1397
    %v1399 = vpop.permute.xlu0 %1398
    %v1400 = vlaneseq
    %v1401 = vshrl.u32 %v1400, 7
    %v1402 = vsub.s32 0, %v1401
    %v1403 = vrot.slane %v1311, %v1402
    %1405 = vbcast.lane.b32.xlu0 %v1403, 256
    %v1406 = vpop.permute.xlu0 %1405
    %s1408 = sor.u32 256, 8
    %1409 = vbcast.lane.b32.xlu0 %v1403, %s1408
    %v1410 = vpop.permute.xlu0 %1409
    %v1411 = vlaneseq
    %v1412 = vshrl.u32 %v1411, 7
    %v1413 = vsub.s32 1, %v1412
    %v1414 = vrot.slane %v1311, %v1413
    %1416 = vbcast.lane.b32.xlu0 %v1414, 256
    %v1417 = vpop.permute.xlu0 %1416
    %s1419 = sor.u32 256, 8
    %1420 = vbcast.lane.b32.xlu0 %v1414, %s1419
    %v1421 = vpop.permute.xlu0 %1420
    %v1422 = vlaneseq
    %v1423 = vshrl.u32 %v1422, 7
    %v1424 = vsub.s32 2, %v1423
    %v1425 = vrot.slane %v1311, %v1424
    %1427 = vbcast.lane.b32.xlu0 %v1425, 256
    %v1428 = vpop.permute.xlu0 %1427
    %s1430 = sor.u32 256, 8
    %1431 = vbcast.lane.b32.xlu0 %v1425, %s1430
    %v1432 = vpop.permute.xlu0 %1431
    %v1433 = vlaneseq
    %v1434 = vshrl.u32 %v1433, 7
    %v1435 = vsub.s32 3, %v1434
    %v1436 = vrot.slane %v1311, %v1435
    %1438 = vbcast.lane.b32.xlu0 %v1436, 256
    %v1439 = vpop.permute.xlu0 %1438
    %s1441 = sor.u32 256, 8
    %1442 = vbcast.lane.b32.xlu0 %v1436, %s1441
    %v1443 = vpop.permute.xlu0 %1442
    %v1444 = vlaneseq
    %v1445 = vshrl.u32 %v1444, 7
    %v1446 = vsub.s32 4, %v1445
    %v1447 = vrot.slane %v1311, %v1446
    %1449 = vbcast.lane.b32.xlu0 %v1447, 256
    %v1450 = vpop.permute.xlu0 %1449
    %s1452 = sor.u32 256, 8
    %1453 = vbcast.lane.b32.xlu0 %v1447, %s1452
    %v1454 = vpop.permute.xlu0 %1453
    %v1455 = vlaneseq
    %v1456 = vshrl.u32 %v1455, 7
    %v1457 = vsub.s32 5, %v1456
    %v1458 = vrot.slane %v1311, %v1457
    %1460 = vbcast.lane.b32.xlu0 %v1458, 256
    %v1461 = vpop.permute.xlu0 %1460
    %s1463 = sor.u32 256, 8
    %1464 = vbcast.lane.b32.xlu0 %v1458, %s1463
    %v1465 = vpop.permute.xlu0 %1464
    %v1466 = vlaneseq
    %v1467 = vshrl.u32 %v1466, 7
    %v1468 = vsub.s32 6, %v1467
    %v1469 = vrot.slane %v1311, %v1468
    %1471 = vbcast.lane.b32.xlu0 %v1469, 256
    %v1472 = vpop.permute.xlu0 %1471
    %s1474 = sor.u32 256, 8
    %1475 = vbcast.lane.b32.xlu0 %v1469, %s1474
    %v1476 = vpop.permute.xlu0 %1475
    %v1477 = vlaneseq
    %v1478 = vshrl.u32 %v1477, 7
    %v1479 = vsub.s32 7, %v1478
    %v1480 = vrot.slane %v1311, %v1479
    %1482 = vbcast.lane.b32.xlu0 %v1480, 256
    %v1483 = vpop.permute.xlu0 %1482
    %s1485 = sor.u32 256, 8
    %1486 = vbcast.lane.b32.xlu0 %v1480, %s1485
    %v1487 = vpop.permute.xlu0 %1486
    %v1488 = vmul.f32 %v1318, %v831
    %v1489 = vmul.f32 %v1322, %v832
    %v1490 = vmul.f32 %v1329, %v833
    %v1491 = vmul.f32 %v1333, %v834
    %v1492 = vmul.f32 %v1340, %v835
    %v1493 = vmul.f32 %v1344, %v836
    %v1494 = vmul.f32 %v1351, %v837
    %v1495 = vmul.f32 %v1355, %v838
    %v1496 = vmul.f32 %v1362, %v839
    %v1497 = vmul.f32 %v1366, %v840
    %v1498 = vmul.f32 %v1373, %v841
    %v1499 = vmul.f32 %v1377, %v842
    %v1500 = vmul.f32 %v1384, %v843
    %v1501 = vmul.f32 %v1388, %v844
    %v1502 = vmul.f32 %v1395, %v845
    %v1503 = vmul.f32 %v1399, %v846
    %v1504 = vmul.f32 %v1406, %v847
    %v1505 = vmul.f32 %v1410, %v848
    %v1506 = vmul.f32 %v1417, %v849
    %v1507 = vmul.f32 %v1421, %v850
    %v1508 = vmul.f32 %v1428, %v851
    %v1509 = vmul.f32 %v1432, %v852
    %v1510 = vmul.f32 %v1439, %v853
    %v1511 = vmul.f32 %v1443, %v854
    %v1512 = vmul.f32 %v1450, %v855
    %v1513 = vmul.f32 %v1454, %v856
    %v1514 = vmul.f32 %v1461, %v857
    %v1515 = vmul.f32 %v1465, %v858
    %v1516 = vmul.f32 %v1472, %v859
    %v1517 = vmul.f32 %v1476, %v860
    %v1518 = vmul.f32 %v1483, %v861
    %v1519 = vmul.f32 %v1487, %v862
    %v1520 = vsel %vm1122, %v1488, 0.0
    %v1521 = vsel %vm1122, %v1489, 0.0
    %v1522 = vadd.f32 %v1520, %v1521
    %v1523 = vrot.slane %v1522, 4
    %v1524 = vadd.f32 %v1522, %v1523
    %v1525 = vrot.slane %v1524, 2
    %v1526 = vadd.f32 %v1524, %v1525
    %v1527 = vrot.slane %v1526, 1
    %v1528 = vadd.f32 %v1526, %v1527
    %v1529 = vsel %vm1122, %v1490, 0.0
    %v1530 = vsel %vm1122, %v1491, 0.0
    %v1531 = vadd.f32 %v1529, %v1530
    %v1532 = vrot.slane %v1531, 4
    %v1533 = vadd.f32 %v1531, %v1532
    %v1534 = vrot.slane %v1533, 2
    %v1535 = vadd.f32 %v1533, %v1534
    %v1536 = vrot.slane %v1535, 1
    %v1537 = vadd.f32 %v1535, %v1536
    %v1538 = vsel %vm1122, %v1492, 0.0
    %v1539 = vsel %vm1122, %v1493, 0.0
    %v1540 = vadd.f32 %v1538, %v1539
    %v1541 = vrot.slane %v1540, 4
    %v1542 = vadd.f32 %v1540, %v1541
    %v1543 = vrot.slane %v1542, 2
    %v1544 = vadd.f32 %v1542, %v1543
    %v1545 = vrot.slane %v1544, 1
    %v1546 = vadd.f32 %v1544, %v1545
    %v1547 = vsel %vm1122, %v1494, 0.0
    %v1548 = vsel %vm1122, %v1495, 0.0
    %v1549 = vadd.f32 %v1547, %v1548
    %v1550 = vrot.slane %v1549, 4
    %v1551 = vadd.f32 %v1549, %v1550
    %v1552 = vrot.slane %v1551, 2
    %v1553 = vadd.f32 %v1551, %v1552
    %v1554 = vrot.slane %v1553, 1
    %v1555 = vadd.f32 %v1553, %v1554
    %v1556 = vsel %vm1122, %v1496, 0.0
    %v1557 = vsel %vm1122, %v1497, 0.0
    %v1558 = vadd.f32 %v1556, %v1557
    %v1559 = vrot.slane %v1558, 4
    %v1560 = vadd.f32 %v1558, %v1559
    %v1561 = vrot.slane %v1560, 2
    %v1562 = vadd.f32 %v1560, %v1561
    %v1563 = vrot.slane %v1562, 1
    %v1564 = vadd.f32 %v1562, %v1563
    %v1565 = vsel %vm1122, %v1498, 0.0
    %v1566 = vsel %vm1122, %v1499, 0.0
    %v1567 = vadd.f32 %v1565, %v1566
    %v1568 = vrot.slane %v1567, 4
    %v1569 = vadd.f32 %v1567, %v1568
    %v1570 = vrot.slane %v1569, 2
    %v1571 = vadd.f32 %v1569, %v1570
    %v1572 = vrot.slane %v1571, 1
    %v1573 = vadd.f32 %v1571, %v1572
    %v1574 = vsel %vm1122, %v1500, 0.0
    %v1575 = vsel %vm1122, %v1501, 0.0
    %v1576 = vadd.f32 %v1574, %v1575
    %v1577 = vrot.slane %v1576, 4
    %v1578 = vadd.f32 %v1576, %v1577
    %v1579 = vrot.slane %v1578, 2
    %v1580 = vadd.f32 %v1578, %v1579
    %v1581 = vrot.slane %v1580, 1
    %v1582 = vadd.f32 %v1580, %v1581
    %v1583 = vsel %vm1122, %v1502, 0.0
    %v1584 = vsel %vm1122, %v1503, 0.0
    %v1585 = vadd.f32 %v1583, %v1584
    %v1586 = vrot.slane %v1585, 4
    %v1587 = vadd.f32 %v1585, %v1586
    %v1588 = vrot.slane %v1587, 2
    %v1589 = vadd.f32 %v1587, %v1588
    %v1590 = vrot.slane %v1589, 1
    %v1591 = vadd.f32 %v1589, %v1590
    %v1592 = vsel %vm1122, %v1504, 0.0
    %v1593 = vsel %vm1122, %v1505, 0.0
    %v1594 = vadd.f32 %v1592, %v1593
    %v1595 = vrot.slane %v1594, 4
    %v1596 = vadd.f32 %v1594, %v1595
    %v1597 = vrot.slane %v1596, 2
    %v1598 = vadd.f32 %v1596, %v1597
    %v1599 = vrot.slane %v1598, 1
    %v1600 = vadd.f32 %v1598, %v1599
    %v1601 = vsel %vm1122, %v1506, 0.0
    %v1602 = vsel %vm1122, %v1507, 0.0
    %v1603 = vadd.f32 %v1601, %v1602
    %v1604 = vrot.slane %v1603, 4
    %v1605 = vadd.f32 %v1603, %v1604
    %v1606 = vrot.slane %v1605, 2
    %v1607 = vadd.f32 %v1605, %v1606
    %v1608 = vrot.slane %v1607, 1
    %v1609 = vadd.f32 %v1607, %v1608
    %v1610 = vsel %vm1122, %v1508, 0.0
    %v1611 = vsel %vm1122, %v1509, 0.0
    %v1612 = vadd.f32 %v1610, %v1611
    %v1613 = vrot.slane %v1612, 4
    %v1614 = vadd.f32 %v1612, %v1613
    %v1615 = vrot.slane %v1614, 2
    %v1616 = vadd.f32 %v1614, %v1615
    %v1617 = vrot.slane %v1616, 1
    %v1618 = vadd.f32 %v1616, %v1617
    %v1619 = vsel %vm1122, %v1510, 0.0
    %v1620 = vsel %vm1122, %v1511, 0.0
    %v1621 = vadd.f32 %v1619, %v1620
    %v1622 = vrot.slane %v1621, 4
    %v1623 = vadd.f32 %v1621, %v1622
    %v1624 = vrot.slane %v1623, 2
    %v1625 = vadd.f32 %v1623, %v1624
    %v1626 = vrot.slane %v1625, 1
    %v1627 = vadd.f32 %v1625, %v1626
    %v1628 = vsel %vm1122, %v1512, 0.0
    %v1629 = vsel %vm1122, %v1513, 0.0
    %v1630 = vadd.f32 %v1628, %v1629
    %v1631 = vrot.slane %v1630, 4
    %v1632 = vadd.f32 %v1630, %v1631
    %v1633 = vrot.slane %v1632, 2
    %v1634 = vadd.f32 %v1632, %v1633
    %v1635 = vrot.slane %v1634, 1
    %v1636 = vadd.f32 %v1634, %v1635
    %v1637 = vsel %vm1122, %v1514, 0.0
    %v1638 = vsel %vm1122, %v1515, 0.0
    %v1639 = vadd.f32 %v1637, %v1638
    %v1640 = vrot.slane %v1639, 4
    %v1641 = vadd.f32 %v1639, %v1640
    %v1642 = vrot.slane %v1641, 2
    %v1643 = vadd.f32 %v1641, %v1642
    %v1644 = vrot.slane %v1643, 1
    %v1645 = vadd.f32 %v1643, %v1644
    %v1646 = vsel %vm1122, %v1516, 0.0
    %v1647 = vsel %vm1122, %v1517, 0.0
    %v1648 = vadd.f32 %v1646, %v1647
    %v1649 = vrot.slane %v1648, 4
    %v1650 = vadd.f32 %v1648, %v1649
    %v1651 = vrot.slane %v1650, 2
    %v1652 = vadd.f32 %v1650, %v1651
    %v1653 = vrot.slane %v1652, 1
    %v1654 = vadd.f32 %v1652, %v1653
    %v1655 = vsel %vm1122, %v1518, 0.0
    %v1656 = vsel %vm1122, %v1519, 0.0
    %v1657 = vadd.f32 %v1655, %v1656
    %v1658 = vrot.slane %v1657, 4
    %v1659 = vadd.f32 %v1657, %v1658
    %v1660 = vrot.slane %v1659, 2
    %v1661 = vadd.f32 %v1659, %v1660
    %v1662 = vrot.slane %v1661, 1
    %v1663 = vadd.f32 %v1661, %v1662
    %s1664 = scalar_lea.vmem %s1, 16
    %v1665 = vld [vmem:[%s1664] sm:$0xff]
    %v1666 = vld [vmem:[%s1664 + $0x8] sm:$0xff]
    %1667 = vrot.lane.b32.xlu0 %v894, 96
    %v1668 = vpop.permute.xlu0 %1667
    %1669 = vrot.lane.b32.xlu0 %v901, 96
    %v1670 = vpop.permute.xlu0 %1669
    %v1673 = vadd.f32 %v1665, %v1668
    %v1674 = vadd.f32 %v1666, %v1670
    %v1691 = vsel %vm881, %v1537, %v1528
    %v1692 = vsel %vm883, %v1546, %v1691
    %v1693 = vsel %vm885, %v1555, %v1692
    %v1694 = vsel %vm887, %v1564, %v1693
    %v1695 = vsel %vm889, %v1573, %v1694
    %v1696 = vsel %vm891, %v1582, %v1695
    %v1697 = vsel %vm893, %v1591, %v1696
    %v1698 = vsel %vm881, %v1609, %v1600
    %v1699 = vsel %vm883, %v1618, %v1698
    %v1700 = vsel %vm885, %v1627, %v1699
    %v1701 = vsel %vm887, %v1636, %v1700
    %v1702 = vsel %vm889, %v1645, %v1701
    %v1703 = vsel %vm891, %v1654, %v1702
    %v1704 = vsel %vm893, %v1663, %v1703
    %v1707 = vadd.f32 %v1673, %v1697
    %v1708 = vadd.f32 %v1674, %v1704
    %s1709 = scalar_lea.vmem %s5, 16
    %v1710 = vld [vmem:[%s1709] sm:$0xf]
    %v1711 = vld [vmem:[%s1709 + $0x4] sm:$0xf]
    %v1712 = vunpack.c.l.bf16 %v1710
    %v1713 = vunpack.c.l.bf16 %v1711
    %v1714 = vlaneseq
    %v1715 = vshrl.u32 %v1714, 7
    %v1716 = vsub.s32 0, %v1715
    %v1717 = vrot.slane %v1712, %v1716
    %1719 = vbcast.lane.b32.xlu0 %v1717, 256
    %v1720 = vpop.permute.xlu0 %1719
    %s1722 = sor.u32 256, 8
    %1723 = vbcast.lane.b32.xlu0 %v1717, %s1722
    %v1724 = vpop.permute.xlu0 %1723
    %v1725 = vlaneseq
    %v1726 = vshrl.u32 %v1725, 7
    %v1727 = vsub.s32 1, %v1726
    %v1728 = vrot.slane %v1712, %v1727
    %1730 = vbcast.lane.b32.xlu0 %v1728, 256
    %v1731 = vpop.permute.xlu0 %1730
    %s1733 = sor.u32 256, 8
    %1734 = vbcast.lane.b32.xlu0 %v1728, %s1733
    %v1735 = vpop.permute.xlu0 %1734
    %v1736 = vlaneseq
    %v1737 = vshrl.u32 %v1736, 7
    %v1738 = vsub.s32 2, %v1737
    %v1739 = vrot.slane %v1712, %v1738
    %1741 = vbcast.lane.b32.xlu0 %v1739, 256
    %v1742 = vpop.permute.xlu0 %1741
    %s1744 = sor.u32 256, 8
    %1745 = vbcast.lane.b32.xlu0 %v1739, %s1744
    %v1746 = vpop.permute.xlu0 %1745
    %v1747 = vlaneseq
    %v1748 = vshrl.u32 %v1747, 7
    %v1749 = vsub.s32 3, %v1748
    %v1750 = vrot.slane %v1712, %v1749
    %1752 = vbcast.lane.b32.xlu0 %v1750, 256
    %v1753 = vpop.permute.xlu0 %1752
    %s1755 = sor.u32 256, 8
    %1756 = vbcast.lane.b32.xlu0 %v1750, %s1755
    %v1757 = vpop.permute.xlu0 %1756
    %v1758 = vlaneseq
    %v1759 = vshrl.u32 %v1758, 7
    %v1760 = vsub.s32 4, %v1759
    %v1761 = vrot.slane %v1712, %v1760
    %1763 = vbcast.lane.b32.xlu0 %v1761, 256
    %v1764 = vpop.permute.xlu0 %1763
    %s1766 = sor.u32 256, 8
    %1767 = vbcast.lane.b32.xlu0 %v1761, %s1766
    %v1768 = vpop.permute.xlu0 %1767
    %v1769 = vlaneseq
    %v1770 = vshrl.u32 %v1769, 7
    %v1771 = vsub.s32 5, %v1770
    %v1772 = vrot.slane %v1712, %v1771
    %1774 = vbcast.lane.b32.xlu0 %v1772, 256
    %v1775 = vpop.permute.xlu0 %1774
    %s1777 = sor.u32 256, 8
    %1778 = vbcast.lane.b32.xlu0 %v1772, %s1777
    %v1779 = vpop.permute.xlu0 %1778
    %v1780 = vlaneseq
    %v1781 = vshrl.u32 %v1780, 7
    %v1782 = vsub.s32 6, %v1781
    %v1783 = vrot.slane %v1712, %v1782
    %1785 = vbcast.lane.b32.xlu0 %v1783, 256
    %v1786 = vpop.permute.xlu0 %1785
    %s1788 = sor.u32 256, 8
    %1789 = vbcast.lane.b32.xlu0 %v1783, %s1788
    %v1790 = vpop.permute.xlu0 %1789
    %v1791 = vlaneseq
    %v1792 = vshrl.u32 %v1791, 7
    %v1793 = vsub.s32 7, %v1792
    %v1794 = vrot.slane %v1712, %v1793
    %1796 = vbcast.lane.b32.xlu0 %v1794, 256
    %v1797 = vpop.permute.xlu0 %1796
    %s1799 = sor.u32 256, 8
    %1800 = vbcast.lane.b32.xlu0 %v1794, %s1799
    %v1801 = vpop.permute.xlu0 %1800
    %v1802 = vlaneseq
    %v1803 = vshrl.u32 %v1802, 7
    %v1804 = vsub.s32 0, %v1803
    %v1805 = vrot.slane %v1713, %v1804
    %1807 = vbcast.lane.b32.xlu0 %v1805, 256
    %v1808 = vpop.permute.xlu0 %1807
    %s1810 = sor.u32 256, 8
    %1811 = vbcast.lane.b32.xlu0 %v1805, %s1810
    %v1812 = vpop.permute.xlu0 %1811
    %v1813 = vlaneseq
    %v1814 = vshrl.u32 %v1813, 7
    %v1815 = vsub.s32 1, %v1814
    %v1816 = vrot.slane %v1713, %v1815
    %1818 = vbcast.lane.b32.xlu0 %v1816, 256
    %v1819 = vpop.permute.xlu0 %1818
    %s1821 = sor.u32 256, 8
    %1822 = vbcast.lane.b32.xlu0 %v1816, %s1821
    %v1823 = vpop.permute.xlu0 %1822
    %v1824 = vlaneseq
    %v1825 = vshrl.u32 %v1824, 7
    %v1826 = vsub.s32 2, %v1825
    %v1827 = vrot.slane %v1713, %v1826
    %1829 = vbcast.lane.b32.xlu0 %v1827, 256
    %v1830 = vpop.permute.xlu0 %1829
    %s1832 = sor.u32 256, 8
    %1833 = vbcast.lane.b32.xlu0 %v1827, %s1832
    %v1834 = vpop.permute.xlu0 %1833
    %v1835 = vlaneseq
    %v1836 = vshrl.u32 %v1835, 7
    %v1837 = vsub.s32 3, %v1836
    %v1838 = vrot.slane %v1713, %v1837
    %1840 = vbcast.lane.b32.xlu0 %v1838, 256
    %v1841 = vpop.permute.xlu0 %1840
    %s1843 = sor.u32 256, 8
    %1844 = vbcast.lane.b32.xlu0 %v1838, %s1843
    %v1845 = vpop.permute.xlu0 %1844
    %v1846 = vlaneseq
    %v1847 = vshrl.u32 %v1846, 7
    %v1848 = vsub.s32 4, %v1847
    %v1849 = vrot.slane %v1713, %v1848
    %1851 = vbcast.lane.b32.xlu0 %v1849, 256
    %v1852 = vpop.permute.xlu0 %1851
    %s1854 = sor.u32 256, 8
    %1855 = vbcast.lane.b32.xlu0 %v1849, %s1854
    %v1856 = vpop.permute.xlu0 %1855
    %v1857 = vlaneseq
    %v1858 = vshrl.u32 %v1857, 7
    %v1859 = vsub.s32 5, %v1858
    %v1860 = vrot.slane %v1713, %v1859
    %1862 = vbcast.lane.b32.xlu0 %v1860, 256
    %v1863 = vpop.permute.xlu0 %1862
    %s1865 = sor.u32 256, 8
    %1866 = vbcast.lane.b32.xlu0 %v1860, %s1865
    %v1867 = vpop.permute.xlu0 %1866
    %v1868 = vlaneseq
    %v1869 = vshrl.u32 %v1868, 7
    %v1870 = vsub.s32 6, %v1869
    %v1871 = vrot.slane %v1713, %v1870
    %1873 = vbcast.lane.b32.xlu0 %v1871, 256
    %v1874 = vpop.permute.xlu0 %1873
    %s1876 = sor.u32 256, 8
    %1877 = vbcast.lane.b32.xlu0 %v1871, %s1876
    %v1878 = vpop.permute.xlu0 %1877
    %v1879 = vlaneseq
    %v1880 = vshrl.u32 %v1879, 7
    %v1881 = vsub.s32 7, %v1880
    %v1882 = vrot.slane %v1713, %v1881
    %1884 = vbcast.lane.b32.xlu0 %v1882, 256
    %v1885 = vpop.permute.xlu0 %1884
    %s1887 = sor.u32 256, 8
    %1888 = vbcast.lane.b32.xlu0 %v1882, %s1887
    %v1889 = vpop.permute.xlu0 %1888
    %v1890 = vmul.f32 %v1720, %v831
    %v1891 = vmul.f32 %v1724, %v832
    %v1892 = vmul.f32 %v1731, %v833
    %v1893 = vmul.f32 %v1735, %v834
    %v1894 = vmul.f32 %v1742, %v835
    %v1895 = vmul.f32 %v1746, %v836
    %v1896 = vmul.f32 %v1753, %v837
    %v1897 = vmul.f32 %v1757, %v838
    %v1898 = vmul.f32 %v1764, %v839
    %v1899 = vmul.f32 %v1768, %v840
    %v1900 = vmul.f32 %v1775, %v841
    %v1901 = vmul.f32 %v1779, %v842
    %v1902 = vmul.f32 %v1786, %v843
    %v1903 = vmul.f32 %v1790, %v844
    %v1904 = vmul.f32 %v1797, %v845
    %v1905 = vmul.f32 %v1801, %v846
    %v1906 = vmul.f32 %v1808, %v847
    %v1907 = vmul.f32 %v1812, %v848
    %v1908 = vmul.f32 %v1819, %v849
    %v1909 = vmul.f32 %v1823, %v850
    %v1910 = vmul.f32 %v1830, %v851
    %v1911 = vmul.f32 %v1834, %v852
    %v1912 = vmul.f32 %v1841, %v853
    %v1913 = vmul.f32 %v1845, %v854
    %v1914 = vmul.f32 %v1852, %v855
    %v1915 = vmul.f32 %v1856, %v856
    %v1916 = vmul.f32 %v1863, %v857
    %v1917 = vmul.f32 %v1867, %v858
    %v1918 = vmul.f32 %v1874, %v859
    %v1919 = vmul.f32 %v1878, %v860
    %v1920 = vmul.f32 %v1885, %v861
    %v1921 = vmul.f32 %v1889, %v862
    %v1922 = vsel %vm1122, %v1890, 0.0
    %v1923 = vsel %vm1122, %v1891, 0.0
    %v1924 = vadd.f32 %v1922, %v1923
    %v1925 = vrot.slane %v1924, 4
    %v1926 = vadd.f32 %v1924, %v1925
    %v1927 = vrot.slane %v1926, 2
    %v1928 = vadd.f32 %v1926, %v1927
    %v1929 = vrot.slane %v1928, 1
    %v1930 = vadd.f32 %v1928, %v1929
    %v1931 = vsel %vm1122, %v1892, 0.0
    %v1932 = vsel %vm1122, %v1893, 0.0
    %v1933 = vadd.f32 %v1931, %v1932
    %v1934 = vrot.slane %v1933, 4
    %v1935 = vadd.f32 %v1933, %v1934
    %v1936 = vrot.slane %v1935, 2
    %v1937 = vadd.f32 %v1935, %v1936
    %v1938 = vrot.slane %v1937, 1
    %v1939 = vadd.f32 %v1937, %v1938
    %v1940 = vsel %vm1122, %v1894, 0.0
    %v1941 = vsel %vm1122, %v1895, 0.0
    %v1942 = vadd.f32 %v1940, %v1941
    %v1943 = vrot.slane %v1942, 4
    %v1944 = vadd.f32 %v1942, %v1943
    %v1945 = vrot.slane %v1944, 2
    %v1946 = vadd.f32 %v1944, %v1945
    %v1947 = vrot.slane %v1946, 1
    %v1948 = vadd.f32 %v1946, %v1947
    %v1949 = vsel %vm1122, %v1896, 0.0
    %v1950 = vsel %vm1122, %v1897, 0.0
    %v1951 = vadd.f32 %v1949, %v1950
    %v1952 = vrot.slane %v1951, 4
    %v1953 = vadd.f32 %v1951, %v1952
    %v1954 = vrot.slane %v1953, 2
    %v1955 = vadd.f32 %v1953, %v1954
    %v1956 = vrot.slane %v1955, 1
    %v1957 = vadd.f32 %v1955, %v1956
    %v1958 = vsel %vm1122, %v1898, 0.0
    %v1959 = vsel %vm1122, %v1899, 0.0
    %v1960 = vadd.f32 %v1958, %v1959
    %v1961 = vrot.slane %v1960, 4
    %v1962 = vadd.f32 %v1960, %v1961
    %v1963 = vrot.slane %v1962, 2
    %v1964 = vadd.f32 %v1962, %v1963
    %v1965 = vrot.slane %v1964, 1
    %v1966 = vadd.f32 %v1964, %v1965
    %v1967 = vsel %vm1122, %v1900, 0.0
    %v1968 = vsel %vm1122, %v1901, 0.0
    %v1969 = vadd.f32 %v1967, %v1968
    %v1970 = vrot.slane %v1969, 4
    %v1971 = vadd.f32 %v1969, %v1970
    %v1972 = vrot.slane %v1971, 2
    %v1973 = vadd.f32 %v1971, %v1972
    %v1974 = vrot.slane %v1973, 1
    %v1975 = vadd.f32 %v1973, %v1974
    %v1976 = vsel %vm1122, %v1902, 0.0
    %v1977 = vsel %vm1122, %v1903, 0.0
    %v1978 = vadd.f32 %v1976, %v1977
    %v1979 = vrot.slane %v1978, 4
    %v1980 = vadd.f32 %v1978, %v1979
    %v1981 = vrot.slane %v1980, 2
    %v1982 = vadd.f32 %v1980, %v1981
    %v1983 = vrot.slane %v1982, 1
    %v1984 = vadd.f32 %v1982, %v1983
    %v1985 = vsel %vm1122, %v1904, 0.0
    %v1986 = vsel %vm1122, %v1905, 0.0
    %v1987 = vadd.f32 %v1985, %v1986
    %v1988 = vrot.slane %v1987, 4
    %v1989 = vadd.f32 %v1987, %v1988
    %v1990 = vrot.slane %v1989, 2
    %v1991 = vadd.f32 %v1989, %v1990
    %v1992 = vrot.slane %v1991, 1
    %v1993 = vadd.f32 %v1991, %v1992
    %v1994 = vsel %vm1122, %v1906, 0.0
    %v1995 = vsel %vm1122, %v1907, 0.0
    %v1996 = vadd.f32 %v1994, %v1995
    %v1997 = vrot.slane %v1996, 4
    %v1998 = vadd.f32 %v1996, %v1997
    %v1999 = vrot.slane %v1998, 2
    %v2000 = vadd.f32 %v1998, %v1999
    %v2001 = vrot.slane %v2000, 1
    %v2002 = vadd.f32 %v2000, %v2001
    %v2003 = vsel %vm1122, %v1908, 0.0
    %v2004 = vsel %vm1122, %v1909, 0.0
    %v2005 = vadd.f32 %v2003, %v2004
    %v2006 = vrot.slane %v2005, 4
    %v2007 = vadd.f32 %v2005, %v2006
    %v2008 = vrot.slane %v2007, 2
    %v2009 = vadd.f32 %v2007, %v2008
    %v2010 = vrot.slane %v2009, 1
    %v2011 = vadd.f32 %v2009, %v2010
    %v2012 = vsel %vm1122, %v1910, 0.0
    %v2013 = vsel %vm1122, %v1911, 0.0
    %v2014 = vadd.f32 %v2012, %v2013
    %v2015 = vrot.slane %v2014, 4
    %v2016 = vadd.f32 %v2014, %v2015
    %v2017 = vrot.slane %v2016, 2
    %v2018 = vadd.f32 %v2016, %v2017
    %v2019 = vrot.slane %v2018, 1
    %v2020 = vadd.f32 %v2018, %v2019
    %v2021 = vsel %vm1122, %v1912, 0.0
    %v2022 = vsel %vm1122, %v1913, 0.0
    %v2023 = vadd.f32 %v2021, %v2022
    %v2024 = vrot.slane %v2023, 4
    %v2025 = vadd.f32 %v2023, %v2024
    %v2026 = vrot.slane %v2025, 2
    %v2027 = vadd.f32 %v2025, %v2026
    %v2028 = vrot.slane %v2027, 1
    %v2029 = vadd.f32 %v2027, %v2028
    %v2030 = vsel %vm1122, %v1914, 0.0
    %v2031 = vsel %vm1122, %v1915, 0.0
    %v2032 = vadd.f32 %v2030, %v2031
    %v2033 = vrot.slane %v2032, 4
    %v2034 = vadd.f32 %v2032, %v2033
    %v2035 = vrot.slane %v2034, 2
    %v2036 = vadd.f32 %v2034, %v2035
    %v2037 = vrot.slane %v2036, 1
    %v2038 = vadd.f32 %v2036, %v2037
    %v2039 = vsel %vm1122, %v1916, 0.0
    %v2040 = vsel %vm1122, %v1917, 0.0
    %v2041 = vadd.f32 %v2039, %v2040
    %v2042 = vrot.slane %v2041, 4
    %v2043 = vadd.f32 %v2041, %v2042
    %v2044 = vrot.slane %v2043, 2
    %v2045 = vadd.f32 %v2043, %v2044
    %v2046 = vrot.slane %v2045, 1
    %v2047 = vadd.f32 %v2045, %v2046
    %v2048 = vsel %vm1122, %v1918, 0.0
    %v2049 = vsel %vm1122, %v1919, 0.0
    %v2050 = vadd.f32 %v2048, %v2049
    %v2051 = vrot.slane %v2050, 4
    %v2052 = vadd.f32 %v2050, %v2051
    %v2053 = vrot.slane %v2052, 2
    %v2054 = vadd.f32 %v2052, %v2053
    %v2055 = vrot.slane %v2054, 1
    %v2056 = vadd.f32 %v2054, %v2055
    %v2057 = vsel %vm1122, %v1920, 0.0
    %v2058 = vsel %vm1122, %v1921, 0.0
    %v2059 = vadd.f32 %v2057, %v2058
    %v2060 = vrot.slane %v2059, 4
    %v2061 = vadd.f32 %v2059, %v2060
    %v2062 = vrot.slane %v2061, 2
    %v2063 = vadd.f32 %v2061, %v2062
    %v2064 = vrot.slane %v2063, 1
    %v2065 = vadd.f32 %v2063, %v2064
    %s2066 = scalar_lea.vmem %s1, 32
    %v2067 = vld [vmem:[%s2066] sm:$0xff]
    %v2068 = vld [vmem:[%s2066 + $0x8] sm:$0xff]
    %2069 = vrot.lane.b32.xlu0 %v894, 64
    %v2070 = vpop.permute.xlu0 %2069
    %2071 = vrot.lane.b32.xlu0 %v901, 64
    %v2072 = vpop.permute.xlu0 %2071
    %v2075 = vadd.f32 %v2067, %v2070
    %v2076 = vadd.f32 %v2068, %v2072
    %v2093 = vsel %vm881, %v1939, %v1930
    %v2094 = vsel %vm883, %v1948, %v2093
    %v2095 = vsel %vm885, %v1957, %v2094
    %v2096 = vsel %vm887, %v1966, %v2095
    %v2097 = vsel %vm889, %v1975, %v2096
    %v2098 = vsel %vm891, %v1984, %v2097
    %v2099 = vsel %vm893, %v1993, %v2098
    %v2100 = vsel %vm881, %v2011, %v2002
    %v2101 = vsel %vm883, %v2020, %v2100
    %v2102 = vsel %vm885, %v2029, %v2101
    %v2103 = vsel %vm887, %v2038, %v2102
    %v2104 = vsel %vm889, %v2047, %v2103
    %v2105 = vsel %vm891, %v2056, %v2104
    %v2106 = vsel %vm893, %v2065, %v2105
    %v2109 = vadd.f32 %v2075, %v2099
    %v2110 = vadd.f32 %v2076, %v2106
    %v2111 = vld [vmem:[%s8] sm:$0xff]
    %v2112 = vld [vmem:[%s8 + $0x8] sm:$0xff]
    %v2113 = vld [vmem:[%s8 + $0x10] sm:$0xff]
    %v2114 = vld [vmem:[%s8 + $0x18] sm:$0xff]
    %v2116 = vsel %vm1122, %v1305, 0
    %v2119 = vsel %vm1122, %v1306, 0
    %v2122 = vsel %vm1122, %v1707, 0
    %v2125 = vsel %vm1122, %v1708, 0
    %v2128 = vsel %vm1122, %v2109, 0
    %v2131 = vsel %vm1122, %v2110, 0
    %2133 = vmatprep.subr.mxu0 0.0
    %2134 = vmatpush1.msra.mxu0 0.0
    %2135 = vmatprep.subr.mxu0 0.0
    %2136 = vmatpush1.msra.mxu0 0.0
    %2137 = vmatprep.subr.mxu0 0.0
    %2138 = vmatpush1.msra.mxu0 0.0
    %2139 = vmatprep.subr.mxu0 0.0
    %2140 = vmatpush1.msra.mxu0 0.0
    %2141 = vmatprep.subr.mxu0 0.0
    %2142 = vmatpush1.msra.mxu0 0.0
    %2143 = vmatprep.subr.mxu0 0.0
    %2144 = vmatpush1.msra.mxu0 0.0
    %2145 = vmatprep.subr.mxu0 0.0
    %2146 = vmatpush1.msra.mxu0 0.0
    %2147 = vmatprep.subr.mxu0 0.0
    %2148 = vmatpush1.msra.mxu0 0.0
    %2149 = vmatprep.subr.mxu0 0.0
    %2150 = vmatpush1.msra.mxu0 0.0
    %2151 = vmatprep.subr.mxu0 0.0
    %2152 = vmatpush1.msra.mxu0 0.0
    %2153 = vmatprep.subr.mxu0 0.0
    %2154 = vmatpush1.msra.mxu0 0.0
    %2155 = vmatprep.subr.mxu0 0.0
    %2156 = vmatpush1.msra.mxu0 0.0
    %2157 = vmatprep.subr.mxu0 0.0
    %2158 = vmatpush1.msra.mxu0 %v2114
    %2159 = vmatprep.subr.mxu0 0.0
    %2160 = vmatpush1.msra.mxu0 %v2113
    %2161 = vmatprep.subr.mxu0 0.0
    %2162 = vmatpush1.msra.mxu0 %v2112
    %2163 = vmatprep.subr.mxu0 0.0
    %2164 = vmatpush1.msra.mxu0 %v2111
    %2165 = vmatprep.subr.mxu0 0.0
    %2166 = vmatpush2.msra.mxu0 0.0
    %2167 = vmatprep.subr.mxu0 0.0
    %2168 = vmatpush2.msra.mxu0 0.0
    %2169 = vmatprep.subr.mxu0 0.0
    %2170 = vmatpush2.msra.mxu0 0.0
    %2171 = vmatprep.subr.mxu0 0.0
    %2172 = vmatpush2.msra.mxu0 0.0
    %2173 = vmatprep.subr.mxu0 0.0
    %2174 = vmatpush2.msra.mxu0 0.0
    %2175 = vmatprep.subr.mxu0 0.0
    %2176 = vmatpush2.msra.mxu0 0.0
    %2177 = vmatprep.subr.mxu0 0.0
    %2178 = vmatpush2.msra.mxu0 0.0
    %2179 = vmatprep.subr.mxu0 0.0
    %2180 = vmatpush2.msra.mxu0 0.0
    %2181 = vmatprep.subr.mxu0 0.0
    %2182 = vmatpush2.msra.mxu0 0.0
    %2183 = vmatprep.subr.mxu0 0.0
    %2184 = vmatpush2.msra.mxu0 0.0
    %2185 = vmatprep.subr.mxu0 0.0
    %2186 = vmatpush2.msra.mxu0 0.0
    %2187 = vmatprep.subr.mxu0 0.0
    %2188 = vmatpush2.msra.mxu0 0.0
    %2189 = vmatprep.subr.mxu0 0.0
    %2190 = vmatpush2.msra.mxu0 0.0
    %2191 = vmatprep.subr.mxu0 0.0
    %2192 = vmatpush2.msra.mxu0 0.0
    %2193 = vmatprep.subr.mxu0 0.0
    %2194 = vmatpush2.msra.mxu0 0.0
    %2195 = vmatprep.subr.mxu0 0.0
    %2196 = vmatpush2.msra.mxu0 0.0
    %2197 = vmatprep.mubr.f32.mxu0 0.0
    %2198 = vmatmul.mubr.f32.gmra.mxu0 %v2116
    %v2199 = vpop.f32.mrf.mxu0
    %v2200 = vadd.f32 0.0, %v2199
    %v2201 = vpop.f32.mrf.mxu0
    %2202 = vmatprep.mubr.f32.mxu0 0.0
    %2203 = vmatmul.mubr.f32.gmra.mxu0 %v2119
    %v2204 = vpop.f32.mrf.mxu0
    %v2205 = vadd.f32 0.0, %v2204
    %v2206 = vpop.f32.mrf.mxu0
    %2207 = vmatprep.mubr.f32.mxu0 0.0
    %2208 = vmatmul.mubr.f32.gmra.mxu0 %v2122
    %v2209 = vpop.f32.mrf.mxu0
    %v2210 = vadd.f32 0.0, %v2209
    %v2211 = vpop.f32.mrf.mxu0
    %2212 = vmatprep.mubr.f32.mxu0 0.0
    %2213 = vmatmul.mubr.f32.gmra.mxu0 %v2125
    %v2214 = vpop.f32.mrf.mxu0
    %v2215 = vadd.f32 0.0, %v2214
    %v2216 = vpop.f32.mrf.mxu0
    %2217 = vmatprep.mubr.f32.mxu0 0.0
    %2218 = vmatmul.mubr.f32.gmra.mxu0 %v2128
    %v2219 = vpop.f32.mrf.mxu0
    %v2220 = vadd.f32 0.0, %v2219
    %v2221 = vpop.f32.mrf.mxu0
    %2222 = vmatprep.mubr.f32.mxu0 0.0
    %2223 = vmatmul.mubr.f32.gmra.mxu0 %v2131
    %v2224 = vpop.f32.mrf.mxu0
    %v2225 = vadd.f32 0.0, %v2224
    %v2226 = vpop.f32.mrf.mxu0
    %2227 = vdwg.mxu0
    %v2228 = vmul.f32 %v2200, %v2200
    %v2229 = vmul.f32 %v2205, %v2205
    %v2230 = vmul.f32 %v2210, %v2210
    %v2231 = vmul.f32 %v2215, %v2215
    %v2232 = vadd.f32 %v2228, %v2230
    %v2233 = vadd.f32 %v2229, %v2231
    %v2234 = vmul.f32 %v2220, %v2220
    %v2235 = vmul.f32 %v2225, %v2225
    %v2236 = vadd.f32 %v2232, %v2234
    %v2237 = vadd.f32 %v2233, %v2235
    %v2238 = vrsqrt.pop %v2236
    %v2239 = vmul.f32 %v2236, %v2238
    %vm2240 = vcmp.eq.f32.partialorder %v2236, inf
    %v2241 = vsel %vm2240, %v2236, %v2239
    %vm2242 = vcmp.eq.f32.partialorder %v2236, 0.0
    %v2243 = vand.u32 %v2236, 2147483648
    %v2244 = vsel %vm2242, %v2243, %v2241
    %v2245 = vrsqrt.pop %v2237
    %v2246 = vmul.f32 %v2237, %v2245
    %vm2247 = vcmp.eq.f32.partialorder %v2237, inf
    %v2248 = vsel %vm2247, %v2237, %v2246
    %vm2249 = vcmp.eq.f32.partialorder %v2237, 0.0
    %v2250 = vand.u32 %v2237, 2147483648
    %v2251 = vsel %vm2249, %v2250, %v2248
    %2254 = vrot.lane.b32.xlu0 %v2200, 96
    %v2255 = vpop.permute.xlu0 %2254
    %2256 = vrot.lane.b32.xlu0 %v2205, 96
    %v2257 = vpop.permute.xlu0 %2256
    %v2260 = vmul.f32 %v2200, %v2255
    %v2261 = vmul.f32 %v2205, %v2257
    %2264 = vrot.lane.b32.xlu0 %v2210, 96
    %v2265 = vpop.permute.xlu0 %2264
    %2266 = vrot.lane.b32.xlu0 %v2215, 96
    %v2267 = vpop.permute.xlu0 %2266
    %v2270 = vmul.f32 %v2210, %v2265
    %v2271 = vmul.f32 %v2215, %v2267
    %v2272 = vadd.f32 %v2260, %v2270
    %v2273 = vadd.f32 %v2261, %v2271
    %2276 = vrot.lane.b32.xlu0 %v2220, 96
    %v2277 = vpop.permute.xlu0 %2276
    %2278 = vrot.lane.b32.xlu0 %v2225, 96
    %v2279 = vpop.permute.xlu0 %2278
    %v2282 = vmul.f32 %v2220, %v2277
    %v2283 = vmul.f32 %v2225, %v2279
    %v2284 = vadd.f32 %v2272, %v2282
    %v2285 = vadd.f32 %v2273, %v2283
    %v2286 = vsel %vm1122, %v908, %v2244
    %v2287 = vsel %vm1122, %v909, %v2251
    %v2288 = vld [vmem:[%s9] sm:$0xff]
    %v2289 = vld [vmem:[%s9 + $0x8] sm:$0xff]
    %v2290 = vld [vmem:[%s9 + $0x10] sm:$0xff]
    %v2291 = vld [vmem:[%s9 + $0x18] sm:$0xff]
    %v2292 = vld [vmem:[%s9 + $0x20] sm:$0xff]
    %v2293 = vld [vmem:[%s9 + $0x28] sm:$0xff]
    %v2294 = vld [vmem:[%s9 + $0x30] sm:$0xff]
    %v2295 = vld [vmem:[%s9 + $0x38] sm:$0xff]
    %v2296 = vld [vmem:[%s10] sm:$0x1]
    %v2298 = vlaneseq
    %v2299 = vshrl.u32 %v2298, 7
    %v2300 = vsub.s32 0, %v2299
    %v2301 = vrot.slane %v2296, %v2300
    %vm2303 = vcmask 523264
    %v2305 = vsel %vm2303, %v2286, 0
    %v2308 = vsel %vm2303, %v2287, 0
    %2310 = vmatprep.subr.mxu0 0.0
    %2311 = vmatpush1.msra.mxu0 0.0
    %2312 = vmatprep.subr.mxu0 0.0
    %2313 = vmatpush1.msra.mxu0 0.0
    %2314 = vmatprep.subr.mxu0 0.0
    %2315 = vmatpush1.msra.mxu0 0.0
    %2316 = vmatprep.subr.mxu0 0.0
    %2317 = vmatpush1.msra.mxu0 0.0
    %2318 = vmatprep.subr.mxu0 0.0
    %2319 = vmatpush1.msra.mxu0 0.0
    %2320 = vmatprep.subr.mxu0 0.0
    %2321 = vmatpush1.msra.mxu0 0.0
    %2322 = vmatprep.subr.mxu0 0.0
    %2323 = vmatpush1.msra.mxu0 0.0
    %2324 = vmatprep.subr.mxu0 0.0
    %2325 = vmatpush1.msra.mxu0 0.0
    %2326 = vmatprep.subr.mxu0 0.0
    %2327 = vmatpush1.msra.mxu0 %v2295
    %2328 = vmatprep.subr.mxu0 0.0
    %2329 = vmatpush1.msra.mxu0 %v2294
    %2330 = vmatprep.subr.mxu0 0.0
    %2331 = vmatpush1.msra.mxu0 %v2293
    %2332 = vmatprep.subr.mxu0 0.0
    %2333 = vmatpush1.msra.mxu0 %v2292
    %2334 = vmatprep.subr.mxu0 0.0
    %2335 = vmatpush1.msra.mxu0 %v2291
    %2336 = vmatprep.subr.mxu0 0.0
    %2337 = vmatpush1.msra.mxu0 %v2290
    %2338 = vmatprep.subr.mxu0 0.0
    %2339 = vmatpush1.msra.mxu0 %v2289
    %2340 = vmatprep.subr.mxu0 0.0
    %2341 = vmatpush1.msra.mxu0 %v2288
    %2342 = vmatprep.subr.mxu0 0.0
    %2343 = vmatpush2.msra.mxu0 0.0
    %2344 = vmatprep.subr.mxu0 0.0
    %2345 = vmatpush2.msra.mxu0 0.0
    %2346 = vmatprep.subr.mxu0 0.0
    %2347 = vmatpush2.msra.mxu0 0.0
    %2348 = vmatprep.subr.mxu0 0.0
    %2349 = vmatpush2.msra.mxu0 0.0
    %2350 = vmatprep.subr.mxu0 0.0
    %2351 = vmatpush2.msra.mxu0 0.0
    %2352 = vmatprep.subr.mxu0 0.0
    %2353 = vmatpush2.msra.mxu0 0.0
    %2354 = vmatprep.subr.mxu0 0.0
    %2355 = vmatpush2.msra.mxu0 0.0
    %2356 = vmatprep.subr.mxu0 0.0
    %2357 = vmatpush2.msra.mxu0 0.0
    %2358 = vmatprep.subr.mxu0 0.0
    %2359 = vmatpush2.msra.mxu0 0.0
    %2360 = vmatprep.subr.mxu0 0.0
    %2361 = vmatpush2.msra.mxu0 0.0
    %2362 = vmatprep.subr.mxu0 0.0
    %2363 = vmatpush2.msra.mxu0 0.0
    %2364 = vmatprep.subr.mxu0 0.0
    %2365 = vmatpush2.msra.mxu0 0.0
    %2366 = vmatprep.subr.mxu0 0.0
    %2367 = vmatpush2.msra.mxu0 0.0
    %2368 = vmatprep.subr.mxu0 0.0
    %2369 = vmatpush2.msra.mxu0 0.0
    %2370 = vmatprep.subr.mxu0 0.0
    %2371 = vmatpush2.msra.mxu0 0.0
    %2372 = vmatprep.subr.mxu0 0.0
    %2373 = vmatpush2.msra.mxu0 0.0
    %2374 = vmatprep.mubr.f32.mxu0 0.0
    %2375 = vmatmul.mubr.f32.gmra.mxu0 %v2305
    %v2376 = vpop.f32.mrf.mxu0
    %v2377 = vadd.f32 %v2301, %v2376
    %v2378 = vpop.f32.mrf.mxu0
    %2379 = vmatprep.mubr.f32.mxu0 0.0
    %2380 = vmatmul.mubr.f32.gmra.mxu0 %v2308
    %v2381 = vpop.f32.mrf.mxu0
    %v2382 = vadd.f32 %v2301, %v2381
    %v2383 = vpop.f32.mrf.mxu0
    %2384 = vdwg.mxu0
    %v2385 = vxor.u32 %v2377, 2147483648
    %v2386 = vxor.u32 %v2382, 2147483648
    %v2387 = vmul.f32 %v2385, 1.442695
    %v2388 = vpow.pop %v2387
    %v2389 = vmul.f32 %v2386, 1.442695
    %v2390 = vpow.pop %v2389
    %v2391 = vadd.f32 %v2388, 1.0
    %v2392 = vadd.f32 %v2390, 1.0
    %v2393 = vrcp.pop %v2391
    %v2394 = vmul.f32 1.0, %v2393
    %v2395 = vrcp.pop %v2392
    %v2396 = vmul.f32 1.0, %v2395
    %v2397 = vmul.f32 %v2377, %v2394
    %v2398 = vmul.f32 %v2382, %v2396
    %v2399 = vld [vmem:[%s11] sm:$0xff]
    %v2400 = vld [vmem:[%s11 + $0x8] sm:$0xff]
    %v2401 = vld [vmem:[%s11 + $0x10] sm:$0xff]
    %v2402 = vld [vmem:[%s11 + $0x18] sm:$0xff]
    %v2403 = vld [vmem:[%s12] sm:$0x1]
    %v2405 = vlaneseq
    %v2406 = vshrl.u32 %v2405, 7
    %v2407 = vsub.s32 0, %v2406
    %v2408 = vrot.slane %v2403, %v2407
    %v2411 = vsel %vm1122, %v2397, 0
    %v2414 = vsel %vm1122, %v2398, 0
    %2416 = vmatprep.subr.mxu0 0.0
    %2417 = vmatpush1.msra.mxu0 0.0
    %2418 = vmatprep.subr.mxu0 0.0
    %2419 = vmatpush1.msra.mxu0 0.0
    %2420 = vmatprep.subr.mxu0 0.0
    %2421 = vmatpush1.msra.mxu0 0.0
    %2422 = vmatprep.subr.mxu0 0.0
    %2423 = vmatpush1.msra.mxu0 0.0
    %2424 = vmatprep.subr.mxu0 0.0
    %2425 = vmatpush1.msra.mxu0 0.0
    %2426 = vmatprep.subr.mxu0 0.0
    %2427 = vmatpush1.msra.mxu0 0.0
    %2428 = vmatprep.subr.mxu0 0.0
    %2429 = vmatpush1.msra.mxu0 0.0
    %2430 = vmatprep.subr.mxu0 0.0
    %2431 = vmatpush1.msra.mxu0 0.0
    %2432 = vmatprep.subr.mxu0 0.0
    %2433 = vmatpush1.msra.mxu0 0.0
    %2434 = vmatprep.subr.mxu0 0.0
    %2435 = vmatpush1.msra.mxu0 0.0
    %2436 = vmatprep.subr.mxu0 0.0
    %2437 = vmatpush1.msra.mxu0 0.0
    %2438 = vmatprep.subr.mxu0 0.0
    %2439 = vmatpush1.msra.mxu0 0.0
    %2440 = vmatprep.subr.mxu0 0.0
    %2441 = vmatpush1.msra.mxu0 %v2402
    %2442 = vmatprep.subr.mxu0 0.0
    %2443 = vmatpush1.msra.mxu0 %v2401
    %2444 = vmatprep.subr.mxu0 0.0
    %2445 = vmatpush1.msra.mxu0 %v2400
    %2446 = vmatprep.subr.mxu0 0.0
    %2447 = vmatpush1.msra.mxu0 %v2399
    %2448 = vmatprep.subr.mxu0 0.0
    %2449 = vmatpush2.msra.mxu0 0.0
    %2450 = vmatprep.subr.mxu0 0.0
    %2451 = vmatpush2.msra.mxu0 0.0
    %2452 = vmatprep.subr.mxu0 0.0
    %2453 = vmatpush2.msra.mxu0 0.0
    %2454 = vmatprep.subr.mxu0 0.0
    %2455 = vmatpush2.msra.mxu0 0.0
    %2456 = vmatprep.subr.mxu0 0.0
    %2457 = vmatpush2.msra.mxu0 0.0
    %2458 = vmatprep.subr.mxu0 0.0
    %2459 = vmatpush2.msra.mxu0 0.0
    %2460 = vmatprep.subr.mxu0 0.0
    %2461 = vmatpush2.msra.mxu0 0.0
    %2462 = vmatprep.subr.mxu0 0.0
    %2463 = vmatpush2.msra.mxu0 0.0
    %2464 = vmatprep.subr.mxu0 0.0
    %2465 = vmatpush2.msra.mxu0 0.0
    %2466 = vmatprep.subr.mxu0 0.0
    %2467 = vmatpush2.msra.mxu0 0.0
    %2468 = vmatprep.subr.mxu0 0.0
    %2469 = vmatpush2.msra.mxu0 0.0
    %2470 = vmatprep.subr.mxu0 0.0
    %2471 = vmatpush2.msra.mxu0 0.0
    %2472 = vmatprep.subr.mxu0 0.0
    %2473 = vmatpush2.msra.mxu0 0.0
    %2474 = vmatprep.subr.mxu0 0.0
    %2475 = vmatpush2.msra.mxu0 0.0
    %2476 = vmatprep.subr.mxu0 0.0
    %2477 = vmatpush2.msra.mxu0 0.0
    %2478 = vmatprep.subr.mxu0 0.0
    %2479 = vmatpush2.msra.mxu0 0.0
    %2480 = vmatprep.mubr.f32.mxu0 0.0
    %2481 = vmatmul.mubr.f32.gmra.mxu0 %v2411
    %v2482 = vpop.f32.mrf.mxu0
    %v2483 = vadd.f32 %v2408, %v2482
    %v2484 = vpop.f32.mrf.mxu0
    %2485 = vmatprep.mubr.f32.mxu0 0.0
    %2486 = vmatmul.mubr.f32.gmra.mxu0 %v2414
    %v2487 = vpop.f32.mrf.mxu0
    %v2488 = vadd.f32 %v2408, %v2487
    %v2489 = vpop.f32.mrf.mxu0
    %2490 = vdwg.mxu0
    %2493 = vrot.lane.b32.xlu0 %v2483, 96
    %v2494 = vpop.permute.xlu0 %2493
    %2495 = vrot.lane.b32.xlu0 %v2488, 96
    %v2496 = vpop.permute.xlu0 %2495
    %v2499 = vmul.f32 %v2284, %v2494
    %v2500 = vmul.f32 %v2285, %v2496
    %v2501 = vadd.f32 %v908, %v2499
    %v2502 = vadd.f32 %v909, %v2500
    %2503 = vrot.lane.b32.xlu0 %v2483, 64
    %v2504 = vpop.permute.xlu0 %2503
    %2505 = vrot.lane.b32.xlu0 %v2488, 64
    %v2506 = vpop.permute.xlu0 %2505
    %v2509 = vadd.f32 %v2501, %v2504
    %v2510 = vadd.f32 %v2502, %v2506
    %v2511 = vmul.f32 %v2483, %v2200
    %v2512 = vmul.f32 %v2488, %v2205
    %v2513 = vadd.f32 %v1305, %v2511
    %v2514 = vadd.f32 %v1306, %v2512
    %v2515 = vmul.f32 %v2483, %v2210
    %v2516 = vmul.f32 %v2488, %v2215
    %v2517 = vadd.f32 %v1707, %v2515
    %v2518 = vadd.f32 %v1708, %v2516
    %v2519 = vmul.f32 %v2483, %v2220
    %v2520 = vmul.f32 %v2488, %v2225
    %v2521 = vadd.f32 %v2109, %v2519
    %v2522 = vadd.f32 %v2110, %v2520
    %2525 = vrot.lane.b32.xlu0 %v2513, 32
    %v2526 = vpop.permute.xlu0 %2525
    %2527 = vrot.lane.b32.xlu0 %v2514, 32
    %v2528 = vpop.permute.xlu0 %2527
    %2533 = vrot.lane.b32.xlu0 %v2517, 64
    %v2534 = vpop.permute.xlu0 %2533
    %2535 = vrot.lane.b32.xlu0 %v2518, 64
    %v2536 = vpop.permute.xlu0 %2535
    %2541 = vrot.lane.b32.xlu0 %v2521, 96
    %v2542 = vpop.permute.xlu0 %2541
    %2543 = vrot.lane.b32.xlu0 %v2522, 96
    %v2544 = vpop.permute.xlu0 %2543
    %v2547 = vsel %vm1122, %v2509, %v2526
    %v2548 = vsel %vm1122, %v2510, %v2528
    %v2549 = vsel %vm2303, %v2547, %v2534
    %v2550 = vsel %vm2303, %v2548, %v2536
    %vm2551 = vcmask 785408
    %v2552 = vsel %vm2551, %v2549, %v2542
    %v2553 = vsel %vm2551, %v2550, %v2544
    %2554 = vst [vmem:[#allocation5] sm:$0xff] %v2552
    %2555 = vst [vmem:[#allocation5 + $0x8] sm:$0xff] %v2553
    // Predicated region
    $region58: #{tpu_custom_call.1} parent=1 // pred_check
      _
    $region59: #{tpu_custom_call.1} parent=1 // pred_check_branch
      %2557 = sbr.rel (0) target = $region61
    $region60: #{tpu_custom_call.1} parent=1 // pred_region
      %s2559 = ssub.s32 256, 256
      %2560 = vsyncadd [#allocation4], %s2559
      %s2561 = sshll.u32 [#allocation5], 4
      %s2562 = int_to_ptr.vmem [resolvable:$true] %s2561
      %2567 = dma.vmem_to_hbm [thread:$0]  %s2562, 256, %s13, [#allocation4], 128, 128, 8
    $region61: #{tpu_custom_call.1} parent=1 // pred_fallthru
      _
    // Predicated region
    $region62: #{tpu_custom_call.1} parent=1 // pred_check
      _
    $region63: #{tpu_custom_call.1} parent=1 // pred_check_branch
      %2569 = sbr.rel (0) target = $region65
    $region64: #{tpu_custom_call.1} parent=1 // pred_region
      %2570 = dma.done [#allocation4], 256
    $region65: #{tpu_custom_call.1} parent=1 // pred_fallthru
      _
    %2571 = vsyncpa [#allocation3], 1
    %2572 = vsyncpa [#allocation4], 1

</llo_original>
